<compile_context>
chip_gen: v7x
topology: tpu7x:2x2x1
jax: 0.10.0
libtpu: 0.0.40
codegen_flags: <defaults>
</compile_context>

<pallas_src>
import math
import jax
import jax.numpy as jnp
from jax.experimental import pallas as pl
from jax.experimental.pallas import tpu as pltpu


def _vmem_capacity_bytes():
    """Generation-aware VMEM capacity; conservative v7x default on failure."""
    try:
        return int(pltpu.get_tpu_info().vmem_capacity_bytes)
    except Exception:
        return 64 << 20


def _make_fused_kernel(P, TB, H, W, C, inner, K, use_bf16_mxu, fuse_matmul):
    """Kernel body: P fused SepConv2d projections on one (TB,H,W,C) tile."""
    pad = (K - 1) // 2
    Wp = W + 2 * pad
    M = TB * H * W
    mxu_dtype = jnp.bfloat16 if use_bf16_mxu else jnp.float32

    def kernel(x_ref, dww_ref, dwb_ref, pww_ref, pwb_ref, out_ref, xpad_ref,
               *maybe_a):
        # ---- in-kernel zero padding: only the halo border is zeroed ------
        if pad > 0:
            xpad_ref[:, :pad, :, :] = jnp.zeros((TB, pad, Wp, C), jnp.float32)
            xpad_ref[:, pad + H:, :, :] = jnp.zeros((TB, pad, Wp, C), jnp.float32)
            xpad_ref[:, pad:pad + H, :pad, :] = jnp.zeros((TB, H, pad, C), jnp.float32)
            xpad_ref[:, pad:pad + H, pad + W:, :] = jnp.zeros((TB, H, pad, C), jnp.float32)
        xpad_ref[:, pad:pad + H, pad:pad + W, :] = x_ref[...].astype(jnp.float32)

        # ---- hoisted weight loads (once per step, not per tap) -----------
        dww = dww_ref[...].astype(jnp.float32)     # (P, K*K, C)
        dwb = dwb_ref[...].astype(jnp.float32)     # (P, C)
        pww = pww_ref[...].astype(mxu_dtype)       # (P*C,P*inner) or (P,C,inner)
        pwb = pwb_ref[...].astype(jnp.float32)     # (1,P*inner)   or (P,inner)

        # ---- depthwise KxK conv: ref-sliced window loads shared by all P -
        accs = [None] * P
        for ky in range(K):
            for kx in range(K):
                tap = ky * K + kx
                win = xpad_ref[:, ky:ky + H, kx:kx + W, :]     # (TB,H,W,C) f32
                for p in range(P):
                    term = win * dww[p, tap]
                    accs[p] = term if tap == 0 else accs[p] + term

        # bias + ReLU, flattened to (M, C) rows for the MXU
        acts = [jnp.maximum(accs[p] + dwb[p], 0.0).reshape(M, C)
                for p in range(P)]

        if fuse_matmul:
            # One block-diagonal matmul for all P pointwise convs.
            a_ref = maybe_a[0]                                  # (M, P*C) f32
            for p in range(P):
                a_ref[:, p * C:(p + 1) * C] = acts[p]
            lhs = a_ref[...].astype(mxu_dtype)
            y = jnp.dot(lhs, pww, preferred_element_type=jnp.float32)
            y = y + pwb[0]                                      # (M, P*inner)
            out_ref[...] = y.reshape(TB, H * W, P * inner).astype(out_ref.dtype)
        else:
            # Per-projection matmul; writes are inner-wide (lane-dense when
            # inner >= 128, as at real Uformer sizes).
            for p in range(P):
                lhs = acts[p].astype(mxu_dtype)
                yp = jnp.dot(lhs, pww[p], preferred_element_type=jnp.float32)
                yp = yp + pwb[p]
                out_ref[:, :, p * inner:(p + 1) * inner] = (
                    yp.reshape(TB, H * W, inner).astype(out_ref.dtype))

    return kernel


def _pick_tb(B, H, W, C, P, inner, K, vmem_cap):
    """Pick batch-tile TB so pipelined blocks + temporaries fit VMEM."""
    pad = (K - 1) // 2
    Hp, Wp = H + 2 * pad, W + 2 * pad
    budget = int(vmem_cap * 0.35)          # headroom also on v7x's 64 MiB

    in_b = H * W * C * 4                   # pipelined x block (f32)
    out_b = H * W * P * inner * 4          # pipelined output slab
    scr_b = Hp * Wp * C * 4                # xpad scratch
    acc_b = P * H * W * C * 4              # depthwise accumulators/activations
    asm_b = H * W * P * C * 4              # matmul LHS assembly scratch
    y_b = 2 * H * W * P * inner * 4        # matmul result + cast temporaries
    per_b = 3 * in_b + 2 * out_b + scr_b + acc_b + asm_b + y_b

    weights_b = 4 * (P * K * K * C + P * C + P * C * P * inner + P * inner)
    tb = max(1, min(B, (budget - weights_b) // max(per_b, 1)))
    if B >= 2:
        tb = min(tb, B // 2)               # >=2 grid steps so v7x megacore works
    tb = max(1, tb)
    while B % tb:                          # keep every block full
        tb -= 1
    return int(tb)


def _block_diag(pw_w):
    """(P, C, inner) -> block-diagonal (P*C, P*inner)."""
    P, C, inner = pw_w.shape
    out = jnp.zeros((P * C, P * inner), pw_w.dtype)
    for p in range(P):
        out = out.at[p * C:(p + 1) * C, p * inner:(p + 1) * inner].set(pw_w[p])
    return out


def sepconv_multi_pallas(x_nhwc, dw_w, dw_b, pw_w, pw_b, heads, *, K=3,
                         use_bf16_mxu=True, fuse_matmul=None):
    """P fused SepConv2d projections (stride=1, pad=(K-1)//2) on one image.

    x_nhwc: (B, H, W, C)
    dw_w:   (P, K*K, C)   depthwise weights, tap-major
    dw_b:   (P, C)
    pw_w:   (P, C, inner) pointwise weights
    pw_b:   (P, inner)
    returns tuple of P arrays, each (B, heads, H*W, inner // heads)
    """
    B, H, W, C = x_nhwc.shape
    P, KK, Cw = dw_w.shape
    assert KK == K * K and Cw == C
    inner = pw_w.shape[-1]
    assert pw_w.shape == (P, C, inner) and inner % heads == 0
    d = inner // heads
    pad = (K - 1) // 2
    Hp, Wp = H + 2 * pad, W + 2 * pad

    if fuse_matmul is None:
        # Fuse the P pointwise matmuls into one block-diagonal matmul when the
        # combined contraction depth still fits one MXU pass on every chip.
        fuse_matmul = (P * C <= 128) and (inner < 128)

    vmem_cap = _vmem_capacity_bytes()
    TB = _pick_tb(B, H, W, C, P, inner, K, vmem_cap)
    num_blocks = B // TB
    M = TB * H * W

    kernel = _make_fused_kernel(P, TB, H, W, C, inner, K, use_bf16_mxu,
                                fuse_matmul)

    x_block = (TB, H, W, C)
    x_map = lambda b: (b, 0, 0, 0)
    if num_blocks >= 6:
        # >=3 steps per TensorCore even under megacore split: deeper input
        # pipelining hides exposed DMA behind the grid-invariant compute.
        x_spec = pl.BlockSpec(x_block, x_map, pipeline_mode=pl.Buffered(3))
    else:
        x_spec = pl.BlockSpec(x_block, x_map)

    if fuse_matmul:
        pw_mat = _block_diag(pw_w)                       # (P*C, P*inner)
        pw_bias = pw_b.reshape(1, P * inner)             # (1, P*inner)
        pw_spec = pl.BlockSpec((P * C, P * inner), lambda b: (0, 0))
        pwb_spec = pl.BlockSpec((1, P * inner), lambda b: (0, 0))
        extra_scratch = [pltpu.VMEM((M, P * C), jnp.float32)]
    else:
        pw_mat = pw_w                                    # (P, C, inner)
        pw_bias = pw_b                                   # (P, inner)
        pw_spec = pl.BlockSpec((P, C, inner), lambda b: (0, 0, 0))
        pwb_spec = pl.BlockSpec((P, inner), lambda b: (0, 0))
        extra_scratch = []

    out_shape = jax.ShapeDtypeStruct((B, H * W, P * inner), x_nhwc.dtype)
    out_spec = pl.BlockSpec((TB, H * W, P * inner), lambda b: (b, 0, 0))

    vmem_limit = max(32 << 20, min(vmem_cap * 3 // 4, 100 << 20))

    y = pl.pallas_call(
        kernel,
        out_shape=out_shape,
        grid_spec=pltpu.PrefetchScalarGridSpec(
            num_scalar_prefetch=0,
            grid=(num_blocks,),
            in_specs=[
                x_spec,
                pl.BlockSpec((P, K * K, C), lambda b: (0, 0, 0)),
                pl.BlockSpec((P, C), lambda b: (0, 0)),
                pw_spec,
                pwb_spec,
            ],
            out_specs=out_spec,
            scratch_shapes=[pltpu.VMEM((TB, Hp, Wp, C), jnp.float32)]
                          + extra_scratch,
        ),
        compiler_params=pltpu.CompilerParams(
            dimension_semantics=("parallel",),
            vmem_limit_bytes=int(vmem_limit),
        ),
    )(x_nhwc, dw_w, dw_b, pw_mat, pw_bias)

    # Lane-dense kernel output (B, N, P*inner): split into per-projection
    # tensors and do the cheap 'b n (h d) -> b h n d' rearrange outside.
    outs = []
    for p in range(P):
        yp = y[:, :, p * inner:(p + 1) * inner].reshape(B, H * W, heads, d)
        outs.append(jnp.transpose(yp, (0, 2, 1, 3)))
    return tuple(outs)


def init_sepconv_params(key, C, inner, K=3):
    k1, k2, k3, k4 = jax.random.split(key, 4)
    dw_w = jax.random.normal(k1, (K * K, C), jnp.float32) * 0.1
    dw_b = jax.random.normal(k2, (1, C), jnp.float32) * 0.1
    pw_w = jax.random.normal(k3, (C, inner), jnp.float32) * 0.1
    pw_b = jax.random.normal(k4, (1, inner), jnp.float32) * 0.1
    return dw_w, dw_b, pw_w, pw_b


def _stack_params(params, names):
    """Stack per-projection SepConv2d params for the fused kernel."""
    dw_w = jnp.stack([params[n][0] for n in names], axis=0)      # (P, K*K, C)
    dw_b = jnp.stack([params[n][1][0] for n in names], axis=0)   # (P, C)
    pw_w = jnp.stack([params[n][2] for n in names], axis=0)      # (P, C, inner)
    pw_b = jnp.stack([params[n][3][0] for n in names], axis=0)   # (P, inner)
    return dw_w, dw_b, pw_w, pw_b


def conv_projection_forward(x, params, heads, attn_kv=None, K=3,
                            use_bf16_mxu=True, fuse_matmul=None):
    """ConvProjection.forward.

    x:       (B, N, C) tokens, N must be a perfect square
    params:  dict with 'q', 'k', 'v' -> SepConv2d params
    returns: q, k, v each of shape (B, heads, N, dim_head)
    """
    B, N, C = x.shape
    L = int(math.sqrt(N))
    assert L * L == N

    x_img = x.reshape(B, L, L, C)          # 'b (l w) c -> b l w c' (NHWC)

    if attn_kv is None:
        # All three projections read the same image: fully fused single call.
        q, k, v = sepconv_multi_pallas(
            x_img, *_stack_params(params, ("q", "k", "v")), heads, K=K,
            use_bf16_mxu=use_bf16_mxu, fuse_matmul=fuse_matmul)
    else:
        kv_img = attn_kv.reshape(B, L, L, C)
        (q,) = sepconv_multi_pallas(
            x_img, *_stack_params(params, ("q",)), heads, K=K,
            use_bf16_mxu=use_bf16_mxu, fuse_matmul=fuse_matmul)
        k, v = sepconv_multi_pallas(
            kv_img, *_stack_params(params, ("k", "v")), heads, K=K,
            use_bf16_mxu=use_bf16_mxu, fuse_matmul=fuse_matmul)
    return q, k, v


def _ref_sepconv(x_nhwc, dw_w, dw_b, pw_w, pw_b, K=3):
    """Pure-JAX reference (lax.conv) for correctness checking."""
    C = x_nhwc.shape[-1]
    w_hwio = dw_w.reshape(K, K, 1, C)
    y = jax.lax.conv_general_dilated(
        x_nhwc, w_hwio, window_strides=(1, 1), padding="SAME",
        dimension_numbers=("NHWC", "HWIO", "NHWC"), feature_group_count=C)
    y = jnp.maximum(y + dw_b[0], 0.0)
    y = y @ pw_w + pw_b[0]
    return y


if __name__ == "__main__":
    # Small shapes consistent with the module: dim=4, N=64 (8x8), heads=2, dim_head=4
    B, N, C = 2, 64, 4
    heads, dim_head = 2, 4
    inner = heads * dim_head
    K = 3
    L = int(math.sqrt(N))

    key = jax.random.PRNGKey(0)
    kx_, kq, kk, kv_, kkv = jax.random.split(key, 5)
    x = jax.random.normal(kx_, (B, N, C), jnp.float32)

    params = {
        "q": init_sepconv_params(kq, C, inner, K),
        "k": init_sepconv_params(kk, C, inner, K),
        "v": init_sepconv_params(kv_, C, inner, K),
    }

    def ref_project(img, p):
        y = _ref_sepconv(img, *p, K=K)
        y = y.reshape(B, N, heads, dim_head)
        return jnp.transpose(y, (0, 2, 1, 3))

    x_img = x.reshape(B, L, L, C)
    rq = ref_project(x_img, params["q"])
    rk = ref_project(x_img, params["k"])
    rv = ref_project(x_img, params["v"])

    # Exact f32 check of the fused (block-diagonal matmul) path.
    q, k, v = conv_projection_forward(x, params, heads, use_bf16_mxu=False)
    jax.block_until_ready((q, k, v))
    assert q.shape == (B, heads, N, dim_head)
    assert k.shape == (B, heads, N, dim_head)
    assert v.shape == (B, heads, N, dim_head)
    assert jnp.allclose(q, rq, atol=1e-5, rtol=1e-5)
    assert jnp.allclose(k, rk, atol=1e-5, rtol=1e-5)
    assert jnp.allclose(v, rv, atol=1e-5, rtol=1e-5)

    # Exact f32 check of the non-fused (per-projection matmul) fallback path.
    q3, k3, v3 = conv_projection_forward(x, params, heads, use_bf16_mxu=False,
                                         fuse_matmul=False)
    jax.block_until_ready((q3, k3, v3))
    assert jnp.allclose(q3, rq, atol=1e-5, rtol=1e-5)
    assert jnp.allclose(k3, rk, atol=1e-5, rtol=1e-5)
    assert jnp.allclose(v3, rv, atol=1e-5, rtol=1e-5)

    # Default fast path: bf16 MXU operands with f32 accumulation.
    qb, kb, vb = conv_projection_forward(x, params, heads)
    jax.block_until_ready((qb, kb, vb))
    assert jnp.allclose(qb, rq, atol=5e-2, rtol=5e-2)
    assert jnp.allclose(kb, rk, atol=5e-2, rtol=5e-2)
    assert jnp.allclose(vb, rv, atol=5e-2, rtol=5e-2)

    # Cross-attention path (attn_kv != x): q alone + fused k/v.
    attn_kv = jax.random.normal(kkv, (B, N, C), jnp.float32)
    q2, k2, v2 = conv_projection_forward(x, params, heads, attn_kv=attn_kv,
                                         use_bf16_mxu=False)
    jax.block_until_ready((q2, k2, v2))
    kv_img = attn_kv.reshape(B, L, L, C)
    assert jnp.allclose(q2, rq, atol=1e-5, rtol=1e-5)
    assert jnp.allclose(k2, ref_project(kv_img, params["k"]), atol=1e-5, rtol=1e-5)
    assert jnp.allclose(v2, ref_project(kv_img, params["v"]), atol=1e-5, rtol=1e-5)

    print("KERNEL_OK")
</pallas_src>

<mosaic_0001>
module attributes {stable_mosaic.version = 11 : i64} {
  func.func @kernel(%arg0: i32, %arg1: memref<1x8x8x4xf32, #tpu.memory_space<vmem>>, %arg2: memref<3x9x4xf32, #tpu.memory_space<vmem>>, %arg3: memref<3x4xf32, #tpu.memory_space<vmem>>, %arg4: memref<12x24xf32, #tpu.memory_space<vmem>>, %arg5: memref<1x24xf32, #tpu.memory_space<vmem>>, %arg6: memref<1x64x24xf32, #tpu.memory_space<vmem>>, %arg7: memref<1x10x10x4xf32, #tpu.memory_space<vmem>>, %arg8: memref<64x12xf32, #tpu.memory_space<vmem>>) attributes {dimension_semantics = [#tpu.dimension_semantics<parallel>], iteration_bounds = array<i64: 2>, scalar_prefetch = 0 : i64, scratch_operands = 2 : i64, tpu.core_type = #tpu.core_type<tc>, window_params = [{transform_indices = @transform_0, window_bounds = array<i64: 1, 8, 8, 4>}, {pipeline_mode = #tpu.pipeline_mode<synchronous>, transform_indices = @transform_1, window_bounds = array<i64: 3, 9, 4>}, {pipeline_mode = #tpu.pipeline_mode<synchronous>, transform_indices = @transform_2, window_bounds = array<i64: 3, 4>}, {pipeline_mode = #tpu.pipeline_mode<synchronous>, transform_indices = @transform_3, window_bounds = array<i64: 12, 24>}, {pipeline_mode = #tpu.pipeline_mode<synchronous>, transform_indices = @transform_4, window_bounds = array<i64: 1, 24>}, {transform_indices = @transform_5, window_bounds = array<i64: 1, 64, 24>}]} {
    %cst = arith.constant 0.000000e+00 : f32
    %0 = vector.broadcast %cst : f32 to vector<1x1x10x4xf32>
    %c0 = arith.constant 0 : index
    %c0_0 = arith.constant 0 : index
    %c0_1 = arith.constant 0 : index
    %c0_2 = arith.constant 0 : index
    %1 = vector.load %arg7[%c0, %c0_0, %c0_1, %c0_2] : memref<1x10x10x4xf32, #tpu.memory_space<vmem>>, vector<1x1x10x4xf32>
    tpu.vector_store %arg7[%c0, %c0_0, %c0_1, %c0_2], %0 {strides = array<i32>} : memref<1x10x10x4xf32, #tpu.memory_space<vmem>>, vector<1x1x10x4xf32>,
    %cst_3 = arith.constant 0.000000e+00 : f32
    %2 = vector.broadcast %cst_3 : f32 to vector<1x1x10x4xf32>
    %c0_4 = arith.constant 0 : index
    %c9 = arith.constant 9 : index
    %c0_5 = arith.constant 0 : index
    %c0_6 = arith.constant 0 : index
    %3 = vector.load %arg7[%c0_4, %c9, %c0_5, %c0_6] : memref<1x10x10x4xf32, #tpu.memory_space<vmem>>, vector<1x1x10x4xf32>
    tpu.vector_store %arg7[%c0_4, %c9, %c0_5, %c0_6], %2 {strides = array<i32>} : memref<1x10x10x4xf32, #tpu.memory_space<vmem>>, vector<1x1x10x4xf32>,
    %cst_7 = arith.constant 0.000000e+00 : f32
    %4 = vector.broadcast %cst_7 : f32 to vector<1x8x1x4xf32>
    %c0_8 = arith.constant 0 : index
    %c1 = arith.constant 1 : index
    %c0_9 = arith.constant 0 : index
    %c0_10 = arith.constant 0 : index
    %5 = vector.load %arg7[%c0_8, %c1, %c0_9, %c0_10] : memref<1x10x10x4xf32, #tpu.memory_space<vmem>>, vector<1x8x1x4xf32>
    tpu.vector_store %arg7[%c0_8, %c1, %c0_9, %c0_10], %4 {strides = array<i32>} : memref<1x10x10x4xf32, #tpu.memory_space<vmem>>, vector<1x8x1x4xf32>,
    %cst_11 = arith.constant 0.000000e+00 : f32
    %6 = vector.broadcast %cst_11 : f32 to vector<1x8x1x4xf32>
    %c0_12 = arith.constant 0 : index
    %c1_13 = arith.constant 1 : index
    %c9_14 = arith.constant 9 : index
    %c0_15 = arith.constant 0 : index
    %7 = vector.load %arg7[%c0_12, %c1_13, %c9_14, %c0_15] : memref<1x10x10x4xf32, #tpu.memory_space<vmem>>, vector<1x8x1x4xf32>
    tpu.vector_store %arg7[%c0_12, %c1_13, %c9_14, %c0_15], %6 {strides = array<i32>} : memref<1x10x10x4xf32, #tpu.memory_space<vmem>>, vector<1x8x1x4xf32>,
    %c0_16 = arith.constant 0 : index
    %c0_17 = arith.constant 0 : index
    %c0_18 = arith.constant 0 : index
    %c0_19 = arith.constant 0 : index
    %8 = vector.load %arg1[%c0_16, %c0_17, %c0_18, %c0_19] : memref<1x8x8x4xf32, #tpu.memory_space<vmem>>, vector<1x8x8x4xf32>
    %c0_20 = arith.constant 0 : index
    %c1_21 = arith.constant 1 : index
    %c1_22 = arith.constant 1 : index
    %c0_23 = arith.constant 0 : index
    %9 = vector.load %arg7[%c0_20, %c1_21, %c1_22, %c0_23] : memref<1x10x10x4xf32, #tpu.memory_space<vmem>>, vector<1x8x8x4xf32>
    tpu.vector_store %arg7[%c0_20, %c1_21, %c1_22, %c0_23], %8 {strides = array<i32>} : memref<1x10x10x4xf32, #tpu.memory_space<vmem>>, vector<1x8x8x4xf32>,
    %c0_24 = arith.constant 0 : index
    %c0_25 = arith.constant 0 : index
    %c0_26 = arith.constant 0 : index
    %10 = vector.load %arg2[%c0_24, %c0_25, %c0_26] : memref<3x9x4xf32, #tpu.memory_space<vmem>>, vector<3x9x4xf32>
    %c0_27 = arith.constant 0 : index
    %c0_28 = arith.constant 0 : index
    %11 = vector.load %arg3[%c0_27, %c0_28] : memref<3x4xf32, #tpu.memory_space<vmem>>, vector<3x4xf32>
    %c0_29 = arith.constant 0 : index
    %c0_30 = arith.constant 0 : index
    %12 = vector.load %arg4[%c0_29, %c0_30] : memref<12x24xf32, #tpu.memory_space<vmem>>, vector<12x24xf32>
    %c0_31 = arith.constant 0 : index
    %c0_32 = arith.constant 0 : index
    %13 = vector.load %arg5[%c0_31, %c0_32] : memref<1x24xf32, #tpu.memory_space<vmem>>, vector<1x24xf32>
    %c0_33 = arith.constant 0 : index
    %c0_34 = arith.constant 0 : index
    %c0_35 = arith.constant 0 : index
    %c0_36 = arith.constant 0 : index
    %14 = vector.load %arg7[%c0_33, %c0_34, %c0_35, %c0_36] : memref<1x10x10x4xf32, #tpu.memory_space<vmem>>, vector<1x8x8x4xf32>
    %15 = vector.extract_strided_slice %10 {offsets = [0, 0, 0], sizes = [1, 1, 4], strides = [1, 1, 1]} : vector<3x9x4xf32> to vector<1x1x4xf32>
    %16 = vector.shape_cast %15 : vector<1x1x4xf32> to vector<4xf32>
    %17 = vector.shape_cast %16 : vector<4xf32> to vector<1x1x1x4xf32>
    %18 = vector.broadcast %17 : vector<1x1x1x4xf32> to vector<1x8x8x4xf32>
    %19 = arith.mulf %14, %18 : vector<1x8x8x4xf32>
    %20 = vector.extract_strided_slice %10 {offsets = [1, 0, 0], sizes = [1, 1, 4], strides = [1, 1, 1]} : vector<3x9x4xf32> to vector<1x1x4xf32>
    %21 = vector.shape_cast %20 : vector<1x1x4xf32> to vector<4xf32>
    %22 = vector.shape_cast %21 : vector<4xf32> to vector<1x1x1x4xf32>
    %23 = vector.broadcast %22 : vector<1x1x1x4xf32> to vector<1x8x8x4xf32>
    %24 = arith.mulf %14, %23 : vector<1x8x8x4xf32>
    %25 = vector.extract_strided_slice %10 {offsets = [2, 0, 0], sizes = [1, 1, 4], strides = [1, 1, 1]} : vector<3x9x4xf32> to vector<1x1x4xf32>
    %26 = vector.shape_cast %25 : vector<1x1x4xf32> to vector<4xf32>
    %27 = vector.shape_cast %26 : vector<4xf32> to vector<1x1x1x4xf32>
    %28 = vector.broadcast %27 : vector<1x1x1x4xf32> to vector<1x8x8x4xf32>
    %29 = arith.mulf %14, %28 : vector<1x8x8x4xf32>
    %c0_37 = arith.constant 0 : index
    %c0_38 = arith.constant 0 : index
    %c1_39 = arith.constant 1 : index
    %c0_40 = arith.constant 0 : index
    %30 = vector.load %arg7[%c0_37, %c0_38, %c1_39, %c0_40] : memref<1x10x10x4xf32, #tpu.memory_space<vmem>>, vector<1x8x8x4xf32>
    %31 = vector.extract_strided_slice %10 {offsets = [0, 1, 0], sizes = [1, 1, 4], strides = [1, 1, 1]} : vector<3x9x4xf32> to vector<1x1x4xf32>
    %32 = vector.shape_cast %31 : vector<1x1x4xf32> to vector<4xf32>
    %33 = vector.shape_cast %32 : vector<4xf32> to vector<1x1x1x4xf32>
    %34 = vector.broadcast %33 : vector<1x1x1x4xf32> to vector<1x8x8x4xf32>
    %35 = arith.mulf %30, %34 : vector<1x8x8x4xf32>
    %36 = arith.addf %19, %35 : vector<1x8x8x4xf32>
    %37 = vector.extract_strided_slice %10 {offsets = [1, 1, 0], sizes = [1, 1, 4], strides = [1, 1, 1]} : vector<3x9x4xf32> to vector<1x1x4xf32>
    %38 = vector.shape_cast %37 : vector<1x1x4xf32> to vector<4xf32>
    %39 = vector.shape_cast %38 : vector<4xf32> to vector<1x1x1x4xf32>
    %40 = vector.broadcast %39 : vector<1x1x1x4xf32> to vector<1x8x8x4xf32>
    %41 = arith.mulf %30, %40 : vector<1x8x8x4xf32>
    %42 = arith.addf %24, %41 : vector<1x8x8x4xf32>
    %43 = vector.extract_strided_slice %10 {offsets = [2, 1, 0], sizes = [1, 1, 4], strides = [1, 1, 1]} : vector<3x9x4xf32> to vector<1x1x4xf32>
    %44 = vector.shape_cast %43 : vector<1x1x4xf32> to vector<4xf32>
    %45 = vector.shape_cast %44 : vector<4xf32> to vector<1x1x1x4xf32>
    %46 = vector.broadcast %45 : vector<1x1x1x4xf32> to vector<1x8x8x4xf32>
    %47 = arith.mulf %30, %46 : vector<1x8x8x4xf32>
    %48 = arith.addf %29, %47 : vector<1x8x8x4xf32>
    %c0_41 = arith.constant 0 : index
    %c0_42 = arith.constant 0 : index
    %c2 = arith.constant 2 : index
    %c0_43 = arith.constant 0 : index
    %49 = vector.load %arg7[%c0_41, %c0_42, %c2, %c0_43] : memref<1x10x10x4xf32, #tpu.memory_space<vmem>>, vector<1x8x8x4xf32>
    %50 = vector.extract_strided_slice %10 {offsets = [0, 2, 0], sizes = [1, 1, 4], strides = [1, 1, 1]} : vector<3x9x4xf32> to vector<1x1x4xf32>
    %51 = vector.shape_cast %50 : vector<1x1x4xf32> to vector<4xf32>
    %52 = vector.shape_cast %51 : vector<4xf32> to vector<1x1x1x4xf32>
    %53 = vector.broadcast %52 : vector<1x1x1x4xf32> to vector<1x8x8x4xf32>
    %54 = arith.mulf %49, %53 : vector<1x8x8x4xf32>
    %55 = arith.addf %36, %54 : vector<1x8x8x4xf32>
    %56 = vector.extract_strided_slice %10 {offsets = [1, 2, 0], sizes = [1, 1, 4], strides = [1, 1, 1]} : vector<3x9x4xf32> to vector<1x1x4xf32>
    %57 = vector.shape_cast %56 : vector<1x1x4xf32> to vector<4xf32>
    %58 = vector.shape_cast %57 : vector<4xf32> to vector<1x1x1x4xf32>
    %59 = vector.broadcast %58 : vector<1x1x1x4xf32> to vector<1x8x8x4xf32>
    %60 = arith.mulf %49, %59 : vector<1x8x8x4xf32>
    %61 = arith.addf %42, %60 : vector<1x8x8x4xf32>
    %62 = vector.extract_strided_slice %10 {offsets = [2, 2, 0], sizes = [1, 1, 4], strides = [1, 1, 1]} : vector<3x9x4xf32> to vector<1x1x4xf32>
    %63 = vector.shape_cast %62 : vector<1x1x4xf32> to vector<4xf32>
    %64 = vector.shape_cast %63 : vector<4xf32> to vector<1x1x1x4xf32>
    %65 = vector.broadcast %64 : vector<1x1x1x4xf32> to vector<1x8x8x4xf32>
    %66 = arith.mulf %49, %65 : vector<1x8x8x4xf32>
    %67 = arith.addf %48, %66 : vector<1x8x8x4xf32>
    %c0_44 = arith.constant 0 : index
    %c1_45 = arith.constant 1 : index
    %c0_46 = arith.constant 0 : index
    %c0_47 = arith.constant 0 : index
    %68 = vector.load %arg7[%c0_44, %c1_45, %c0_46, %c0_47] : memref<1x10x10x4xf32, #tpu.memory_space<vmem>>, vector<1x8x8x4xf32>
    %69 = vector.extract_strided_slice %10 {offsets = [0, 3, 0], sizes = [1, 1, 4], strides = [1, 1, 1]} : vector<3x9x4xf32> to vector<1x1x4xf32>
    %70 = vector.shape_cast %69 : vector<1x1x4xf32> to vector<4xf32>
    %71 = vector.shape_cast %70 : vector<4xf32> to vector<1x1x1x4xf32>
    %72 = vector.broadcast %71 : vector<1x1x1x4xf32> to vector<1x8x8x4xf32>
    %73 = arith.mulf %68, %72 : vector<1x8x8x4xf32>
    %74 = arith.addf %55, %73 : vector<1x8x8x4xf32>
    %75 = vector.extract_strided_slice %10 {offsets = [1, 3, 0], sizes = [1, 1, 4], strides = [1, 1, 1]} : vector<3x9x4xf32> to vector<1x1x4xf32>
    %76 = vector.shape_cast %75 : vector<1x1x4xf32> to vector<4xf32>
    %77 = vector.shape_cast %76 : vector<4xf32> to vector<1x1x1x4xf32>
    %78 = vector.broadcast %77 : vector<1x1x1x4xf32> to vector<1x8x8x4xf32>
    %79 = arith.mulf %68, %78 : vector<1x8x8x4xf32>
    %80 = arith.addf %61, %79 : vector<1x8x8x4xf32>
    %81 = vector.extract_strided_slice %10 {offsets = [2, 3, 0], sizes = [1, 1, 4], strides = [1, 1, 1]} : vector<3x9x4xf32> to vector<1x1x4xf32>
    %82 = vector.shape_cast %81 : vector<1x1x4xf32> to vector<4xf32>
    %83 = vector.shape_cast %82 : vector<4xf32> to vector<1x1x1x4xf32>
    %84 = vector.broadcast %83 : vector<1x1x1x4xf32> to vector<1x8x8x4xf32>
    %85 = arith.mulf %68, %84 : vector<1x8x8x4xf32>
    %86 = arith.addf %67, %85 : vector<1x8x8x4xf32>
    %c0_48 = arith.constant 0 : index
    %c1_49 = arith.constant 1 : index
    %c1_50 = arith.constant 1 : index
    %c0_51 = arith.constant 0 : index
    %87 = vector.load %arg7[%c0_48, %c1_49, %c1_50, %c0_51] : memref<1x10x10x4xf32, #tpu.memory_space<vmem>>, vector<1x8x8x4xf32>
    %88 = vector.extract_strided_slice %10 {offsets = [0, 4, 0], sizes = [1, 1, 4], strides = [1, 1, 1]} : vector<3x9x4xf32> to vector<1x1x4xf32>
    %89 = vector.shape_cast %88 : vector<1x1x4xf32> to vector<4xf32>
    %90 = vector.shape_cast %89 : vector<4xf32> to vector<1x1x1x4xf32>
    %91 = vector.broadcast %90 : vector<1x1x1x4xf32> to vector<1x8x8x4xf32>
    %92 = arith.mulf %87, %91 : vector<1x8x8x4xf32>
    %93 = arith.addf %74, %92 : vector<1x8x8x4xf32>
    %94 = vector.extract_strided_slice %10 {offsets = [1, 4, 0], sizes = [1, 1, 4], strides = [1, 1, 1]} : vector<3x9x4xf32> to vector<1x1x4xf32>
    %95 = vector.shape_cast %94 : vector<1x1x4xf32> to vector<4xf32>
    %96 = vector.shape_cast %95 : vector<4xf32> to vector<1x1x1x4xf32>
    %97 = vector.broadcast %96 : vector<1x1x1x4xf32> to vector<1x8x8x4xf32>
    %98 = arith.mulf %87, %97 : vector<1x8x8x4xf32>
    %99 = arith.addf %80, %98 : vector<1x8x8x4xf32>
    %100 = vector.extract_strided_slice %10 {offsets = [2, 4, 0], sizes = [1, 1, 4], strides = [1, 1, 1]} : vector<3x9x4xf32> to vector<1x1x4xf32>
    %101 = vector.shape_cast %100 : vector<1x1x4xf32> to vector<4xf32>
    %102 = vector.shape_cast %101 : vector<4xf32> to vector<1x1x1x4xf32>
    %103 = vector.broadcast %102 : vector<1x1x1x4xf32> to vector<1x8x8x4xf32>
    %104 = arith.mulf %87, %103 : vector<1x8x8x4xf32>
    %105 = arith.addf %86, %104 : vector<1x8x8x4xf32>
    %c0_52 = arith.constant 0 : index
    %c1_53 = arith.constant 1 : index
    %c2_54 = arith.constant 2 : index
    %c0_55 = arith.constant 0 : index
    %106 = vector.load %arg7[%c0_52, %c1_53, %c2_54, %c0_55] : memref<1x10x10x4xf32, #tpu.memory_space<vmem>>, vector<1x8x8x4xf32>
    %107 = vector.extract_strided_slice %10 {offsets = [0, 5, 0], sizes = [1, 1, 4], strides = [1, 1, 1]} : vector<3x9x4xf32> to vector<1x1x4xf32>
    %108 = vector.shape_cast %107 : vector<1x1x4xf32> to vector<4xf32>
    %109 = vector.shape_cast %108 : vector<4xf32> to vector<1x1x1x4xf32>
    %110 = vector.broadcast %109 : vector<1x1x1x4xf32> to vector<1x8x8x4xf32>
    %111 = arith.mulf %106, %110 : vector<1x8x8x4xf32>
    %112 = arith.addf %93, %111 : vector<1x8x8x4xf32>
    %113 = vector.extract_strided_slice %10 {offsets = [1, 5, 0], sizes = [1, 1, 4], strides = [1, 1, 1]} : vector<3x9x4xf32> to vector<1x1x4xf32>
    %114 = vector.shape_cast %113 : vector<1x1x4xf32> to vector<4xf32>
    %115 = vector.shape_cast %114 : vector<4xf32> to vector<1x1x1x4xf32>
    %116 = vector.broadcast %115 : vector<1x1x1x4xf32> to vector<1x8x8x4xf32>
    %117 = arith.mulf %106, %116 : vector<1x8x8x4xf32>
    %118 = arith.addf %99, %117 : vector<1x8x8x4xf32>
    %119 = vector.extract_strided_slice %10 {offsets = [2, 5, 0], sizes = [1, 1, 4], strides = [1, 1, 1]} : vector<3x9x4xf32> to vector<1x1x4xf32>
    %120 = vector.shape_cast %119 : vector<1x1x4xf32> to vector<4xf32>
    %121 = vector.shape_cast %120 : vector<4xf32> to vector<1x1x1x4xf32>
    %122 = vector.broadcast %121 : vector<1x1x1x4xf32> to vector<1x8x8x4xf32>
    %123 = arith.mulf %106, %122 : vector<1x8x8x4xf32>
    %124 = arith.addf %105, %123 : vector<1x8x8x4xf32>
    %c0_56 = arith.constant 0 : index
    %c2_57 = arith.constant 2 : index
    %c0_58 = arith.constant 0 : index
    %c0_59 = arith.constant 0 : index
    %125 = vector.load %arg7[%c0_56, %c2_57, %c0_58, %c0_59] : memref<1x10x10x4xf32, #tpu.memory_space<vmem>>, vector<1x8x8x4xf32>
    %126 = vector.extract_strided_slice %10 {offsets = [0, 6, 0], sizes = [1, 1, 4], strides = [1, 1, 1]} : vector<3x9x4xf32> to vector<1x1x4xf32>
    %127 = vector.shape_cast %126 : vector<1x1x4xf32> to vector<4xf32>
    %128 = vector.shape_cast %127 : vector<4xf32> to vector<1x1x1x4xf32>
    %129 = vector.broadcast %128 : vector<1x1x1x4xf32> to vector<1x8x8x4xf32>
    %130 = arith.mulf %125, %129 : vector<1x8x8x4xf32>
    %131 = arith.addf %112, %130 : vector<1x8x8x4xf32>
    %132 = vector.extract_strided_slice %10 {offsets = [1, 6, 0], sizes = [1, 1, 4], strides = [1, 1, 1]} : vector<3x9x4xf32> to vector<1x1x4xf32>
    %133 = vector.shape_cast %132 : vector<1x1x4xf32> to vector<4xf32>
    %134 = vector.shape_cast %133 : vector<4xf32> to vector<1x1x1x4xf32>
    %135 = vector.broadcast %134 : vector<1x1x1x4xf32> to vector<1x8x8x4xf32>
    %136 = arith.mulf %125, %135 : vector<1x8x8x4xf32>
    %137 = arith.addf %118, %136 : vector<1x8x8x4xf32>
    %138 = vector.extract_strided_slice %10 {offsets = [2, 6, 0], sizes = [1, 1, 4], strides = [1, 1, 1]} : vector<3x9x4xf32> to vector<1x1x4xf32>
    %139 = vector.shape_cast %138 : vector<1x1x4xf32> to vector<4xf32>
    %140 = vector.shape_cast %139 : vector<4xf32> to vector<1x1x1x4xf32>
    %141 = vector.broadcast %140 : vector<1x1x1x4xf32> to vector<1x8x8x4xf32>
    %142 = arith.mulf %125, %141 : vector<1x8x8x4xf32>
    %143 = arith.addf %124, %142 : vector<1x8x8x4xf32>
    %c0_60 = arith.constant 0 : index
    %c2_61 = arith.constant 2 : index
    %c1_62 = arith.constant 1 : index
    %c0_63 = arith.constant 0 : index
    %144 = vector.load %arg7[%c0_60, %c2_61, %c1_62, %c0_63] : memref<1x10x10x4xf32, #tpu.memory_space<vmem>>, vector<1x8x8x4xf32>
    %145 = vector.extract_strided_slice %10 {offsets = [0, 7, 0], sizes = [1, 1, 4], strides = [1, 1, 1]} : vector<3x9x4xf32> to vector<1x1x4xf32>
    %146 = vector.shape_cast %145 : vector<1x1x4xf32> to vector<4xf32>
    %147 = vector.shape_cast %146 : vector<4xf32> to vector<1x1x1x4xf32>
    %148 = vector.broadcast %147 : vector<1x1x1x4xf32> to vector<1x8x8x4xf32>
    %149 = arith.mulf %144, %148 : vector<1x8x8x4xf32>
    %150 = arith.addf %131, %149 : vector<1x8x8x4xf32>
    %151 = vector.extract_strided_slice %10 {offsets = [1, 7, 0], sizes = [1, 1, 4], strides = [1, 1, 1]} : vector<3x9x4xf32> to vector<1x1x4xf32>
    %152 = vector.shape_cast %151 : vector<1x1x4xf32> to vector<4xf32>
    %153 = vector.shape_cast %152 : vector<4xf32> to vector<1x1x1x4xf32>
    %154 = vector.broadcast %153 : vector<1x1x1x4xf32> to vector<1x8x8x4xf32>
    %155 = arith.mulf %144, %154 : vector<1x8x8x4xf32>
    %156 = arith.addf %137, %155 : vector<1x8x8x4xf32>
    %157 = vector.extract_strided_slice %10 {offsets = [2, 7, 0], sizes = [1, 1, 4], strides = [1, 1, 1]} : vector<3x9x4xf32> to vector<1x1x4xf32>
    %158 = vector.shape_cast %157 : vector<1x1x4xf32> to vector<4xf32>
    %159 = vector.shape_cast %158 : vector<4xf32> to vector<1x1x1x4xf32>
    %160 = vector.broadcast %159 : vector<1x1x1x4xf32> to vector<1x8x8x4xf32>
    %161 = arith.mulf %144, %160 : vector<1x8x8x4xf32>
    %162 = arith.addf %143, %161 : vector<1x8x8x4xf32>
    %c0_64 = arith.constant 0 : index
    %c2_65 = arith.constant 2 : index
    %c2_66 = arith.constant 2 : index
    %c0_67 = arith.constant 0 : index
    %163 = vector.load %arg7[%c0_64, %c2_65, %c2_66, %c0_67] : memref<1x10x10x4xf32, #tpu.memory_space<vmem>>, vector<1x8x8x4xf32>
    %164 = vector.extract_strided_slice %10 {offsets = [0, 8, 0], sizes = [1, 1, 4], strides = [1, 1, 1]} : vector<3x9x4xf32> to vector<1x1x4xf32>
    %165 = vector.shape_cast %164 : vector<1x1x4xf32> to vector<4xf32>
    %166 = vector.shape_cast %165 : vector<4xf32> to vector<1x1x1x4xf32>
    %167 = vector.broadcast %166 : vector<1x1x1x4xf32> to vector<1x8x8x4xf32>
    %168 = arith.mulf %163, %167 : vector<1x8x8x4xf32>
    %169 = arith.addf %150, %168 : vector<1x8x8x4xf32>
    %170 = vector.extract_strided_slice %10 {offsets = [1, 8, 0], sizes = [1, 1, 4], strides = [1, 1, 1]} : vector<3x9x4xf32> to vector<1x1x4xf32>
    %171 = vector.shape_cast %170 : vector<1x1x4xf32> to vector<4xf32>
    %172 = vector.shape_cast %171 : vector<4xf32> to vector<1x1x1x4xf32>
    %173 = vector.broadcast %172 : vector<1x1x1x4xf32> to vector<1x8x8x4xf32>
    %174 = arith.mulf %163, %173 : vector<1x8x8x4xf32>
    %175 = arith.addf %156, %174 : vector<1x8x8x4xf32>
    %176 = vector.extract_strided_slice %10 {offsets = [2, 8, 0], sizes = [1, 1, 4], strides = [1, 1, 1]} : vector<3x9x4xf32> to vector<1x1x4xf32>
    %177 = vector.shape_cast %176 : vector<1x1x4xf32> to vector<4xf32>
    %178 = vector.shape_cast %177 : vector<4xf32> to vector<1x1x1x4xf32>
    %179 = vector.broadcast %178 : vector<1x1x1x4xf32> to vector<1x8x8x4xf32>
    %180 = arith.mulf %163, %179 : vector<1x8x8x4xf32>
    %181 = arith.addf %162, %180 : vector<1x8x8x4xf32>
    %182 = vector.extract_strided_slice %11 {offsets = [0, 0], sizes = [1, 4], strides = [1, 1]} : vector<3x4xf32> to vector<1x4xf32>
    %183 = vector.shape_cast %182 : vector<1x4xf32> to vector<4xf32>
    %184 = vector.shape_cast %183 : vector<4xf32> to vector<1x1x1x4xf32>
    %185 = vector.broadcast %184 : vector<1x1x1x4xf32> to vector<1x8x8x4xf32>
    %186 = arith.addf %169, %185 : vector<1x8x8x4xf32>
    %cst_68 = arith.constant 0.000000e+00 : f32
    %187 = vector.broadcast %cst_68 : f32 to vector<1x8x8x4xf32>
    %188 = arith.maximumf %186, %187 : vector<1x8x8x4xf32>
    %189 = vector.shape_cast %188 : vector<1x8x8x4xf32> to vector<64x4xf32>
    %190 = vector.extract_strided_slice %11 {offsets = [1, 0], sizes = [1, 4], strides = [1, 1]} : vector<3x4xf32> to vector<1x4xf32>
    %191 = vector.shape_cast %190 : vector<1x4xf32> to vector<4xf32>
    %192 = vector.shape_cast %191 : vector<4xf32> to vector<1x1x1x4xf32>
    %193 = vector.broadcast %192 : vector<1x1x1x4xf32> to vector<1x8x8x4xf32>
    %194 = arith.addf %175, %193 : vector<1x8x8x4xf32>
    %cst_69 = arith.constant 0.000000e+00 : f32
    %195 = vector.broadcast %cst_69 : f32 to vector<1x8x8x4xf32>
    %196 = arith.maximumf %194, %195 : vector<1x8x8x4xf32>
    %197 = vector.shape_cast %196 : vector<1x8x8x4xf32> to vector<64x4xf32>
    %198 = vector.extract_strided_slice %11 {offsets = [2, 0], sizes = [1, 4], strides = [1, 1]} : vector<3x4xf32> to vector<1x4xf32>
    %199 = vector.shape_cast %198 : vector<1x4xf32> to vector<4xf32>
    %200 = vector.shape_cast %199 : vector<4xf32> to vector<1x1x1x4xf32>
    %201 = vector.broadcast %200 : vector<1x1x1x4xf32> to vector<1x8x8x4xf32>
    %202 = arith.addf %181, %201 : vector<1x8x8x4xf32>
    %cst_70 = arith.constant 0.000000e+00 : f32
    %203 = vector.broadcast %cst_70 : f32 to vector<1x8x8x4xf32>
    %204 = arith.maximumf %202, %203 : vector<1x8x8x4xf32>
    %205 = vector.shape_cast %204 : vector<1x8x8x4xf32> to vector<64x4xf32>
    %c0_71 = arith.constant 0 : index
    %c0_72 = arith.constant 0 : index
    %206 = vector.load %arg8[%c0_71, %c0_72] : memref<64x12xf32, #tpu.memory_space<vmem>>, vector<64x4xf32>
    tpu.vector_store %arg8[%c0_71, %c0_72], %189 {strides = array<i32>} : memref<64x12xf32, #tpu.memory_space<vmem>>, vector<64x4xf32>,
    %c0_73 = arith.constant 0 : index
    %c4 = arith.constant 4 : index
    %207 = vector.load %arg8[%c0_73, %c4] : memref<64x12xf32, #tpu.memory_space<vmem>>, vector<64x4xf32>
    tpu.vector_store %arg8[%c0_73, %c4], %197 {strides = array<i32>} : memref<64x12xf32, #tpu.memory_space<vmem>>, vector<64x4xf32>,
    %c0_74 = arith.constant 0 : index
    %c8 = arith.constant 8 : index
    %208 = vector.load %arg8[%c0_74, %c8] : memref<64x12xf32, #tpu.memory_space<vmem>>, vector<64x4xf32>
    tpu.vector_store %arg8[%c0_74, %c8], %205 {strides = array<i32>} : memref<64x12xf32, #tpu.memory_space<vmem>>, vector<64x4xf32>,
    %c0_75 = arith.constant 0 : index
    %c0_76 = arith.constant 0 : index
    %209 = vector.load %arg8[%c0_75, %c0_76] : memref<64x12xf32, #tpu.memory_space<vmem>>, vector<64x12xf32>
    %cst_77 = arith.constant dense<0.000000e+00> : vector<64x24xf32>
    %210 = tpu.matmul %209, %12, %cst_77 {dimension_numbers = #tpu.dot_dimension_numbers<[1], [0], [0], [1], [0, 0, 1, 1], [], []>} : vector<64x12xf32>, vector<12x24xf32>, vector<64x24xf32> -> vector<64x24xf32>
    %211 = vector.shape_cast %13 : vector<1x24xf32> to vector<24xf32>
    %212 = vector.shape_cast %211 : vector<24xf32> to vector<1x24xf32>
    %213 = vector.broadcast %212 : vector<1x24xf32> to vector<64x24xf32>
    %214 = arith.addf %210, %213 : vector<64x24xf32>
    %215 = vector.shape_cast %214 : vector<64x24xf32> to vector<1x64x24xf32>
    %c0_78 = arith.constant 0 : index
    %c0_79 = arith.constant 0 : index
    %c0_80 = arith.constant 0 : index
    %216 = vector.load %arg6[%c0_78, %c0_79, %c0_80] : memref<1x64x24xf32, #tpu.memory_space<vmem>>, vector<1x64x24xf32>
    tpu.vector_store %arg6[%c0_78, %c0_79, %c0_80], %215 {strides = array<i32>} : memref<1x64x24xf32, #tpu.memory_space<vmem>>, vector<1x64x24xf32>,
    return
  }
  func.func @transform_0(%arg0: i32) -> (i32, i32, i32, i32) {
    %c0_i32 = arith.constant 0 : i32
    %c0_i32_0 = arith.constant 0 : i32
    %c0_i32_1 = arith.constant 0 : i32
    %c0_i32_2 = arith.constant 0 : i32
    return %arg0, %c0_i32, %c0_i32_0, %c0_i32_1 : i32, i32, i32, i32
  }
  func.func @transform_1(%arg0: i32) -> (i32, i32, i32) {
    %c0_i32 = arith.constant 0 : i32
    %c0_i32_0 = arith.constant 0 : i32
    %c0_i32_1 = arith.constant 0 : i32
    %c0_i32_2 = arith.constant 0 : i32
    return %c0_i32, %c0_i32_0, %c0_i32_1 : i32, i32, i32
  }
  func.func @transform_2(%arg0: i32) -> (i32, i32) {
    %c0_i32 = arith.constant 0 : i32
    %c0_i32_0 = arith.constant 0 : i32
    %c0_i32_1 = arith.constant 0 : i32
    return %c0_i32, %c0_i32_0 : i32, i32
  }
  func.func @transform_3(%arg0: i32) -> (i32, i32) {
    %c0_i32 = arith.constant 0 : i32
    %c0_i32_0 = arith.constant 0 : i32
    %c0_i32_1 = arith.constant 0 : i32
    return %c0_i32, %c0_i32_0 : i32, i32
  }
  func.func @transform_4(%arg0: i32) -> (i32, i32) {
    %c0_i32 = arith.constant 0 : i32
    %c0_i32_0 = arith.constant 0 : i32
    %c0_i32_1 = arith.constant 0 : i32
    return %c0_i32, %c0_i32_0 : i32, i32
  }
  func.func @transform_5(%arg0: i32) -> (i32, i32, i32) {
    %c0_i32 = arith.constant 0 : i32
    %c0_i32_0 = arith.constant 0 : i32
    %c0_i32_1 = arith.constant 0 : i32
    return %arg0, %c0_i32, %c0_i32_0 : i32, i32, i32
  }
}

</mosaic_0001>

<llo_original>
// kernel: tpu_custom_call.1
$region0: #{tpu_custom_call.1}
  #allocation0 [shape = 'u32[]', space=smem, size = 0x4, offset = 0x4, fixed_abs, tag = 'smem constant byte address 0x4 - core index']
  #allocation1 [shape = 'u32[144,128]{1,0:T(1,128)}', space=vmem, size = 0x12000, scoped, tag = 'internal scratch']
  #allocation2 [shape = 'f32[1,10,10,4]{3,2,1,0:T(8,128)}', space=vmem, size = 0x14000, scoped, tag = 'scratch operand']
  #allocation3 [shape = 'f32[64,12]{1,0:T(8,128)}', space=vmem, size = 0x8000, scoped, tag = 'scratch operand']
  %s0 = inlined_call_operand.vmem [shape: f32[2,8,8,4], index: 0, kind: input, shape index: {}]
  %s1 = inlined_call_operand.vmem [shape: f32[3,9,4], index: 1, kind: input, shape index: {}]
  %s2 = inlined_call_operand.vmem [shape: f32[3,4], index: 2, kind: input, shape index: {}]
  %s3 = inlined_call_operand.vmem [shape: f32[12,24], index: 3, kind: input, shape index: {}]
  %s4 = inlined_call_operand.vmem [shape: f32[1,24], index: 4, kind: input, shape index: {}]
  %s5 = inlined_call_operand.vmem [shape: f32[2,64,24], index: 5, kind: output, shape index: {}]
  %s6 = sld [smem:[#allocation0]]
  $region53: #{tpu_custom_call.1} parent=0
    _
  %s8 = ssub.s32 1, %s6
  %s9 = scalar_select 0, %s8, %s6
  loop: start=0, step=1, limit=4
  $region2: #{tpu_custom_call.1} parent=0 // loop_pre_header
    _
  $region3: #{tpu_custom_call.1} parent=0 // loop_header
    %s11 = sphi 0, %s15
    %p12 = scmp.ge.s32.totalorder %s11, 4
    %s21 = sphi 0, %s23
    %s24 = sphi 0, %s21
    %s25 = sphi 0, %s24
    %s41 = sphi 0, %s25
    %s45 = sphi 0, %s45
    %s47 = sphi 0, %s45
    %s48 = sphi 0, %s47
    %s62 = sphi 0, %s48
    %s66 = sphi 0, %s66
    %s68 = sphi 0, %s66
    %s69 = sphi 0, %s68
    %s83 = sphi 0, %s69
    %s87 = sphi 0, %s87
    %s89 = sphi 0, %s87
    %s90 = sphi 0, %s89
    %s104 = sphi 0, %s90
    %s108 = sphi 0, %s108
    %s110 = sphi 0, %s108
    %s111 = sphi 0, %s110
    %s125 = sphi 0, %s111
    %s131 = sphi 0, %s133
    %s134 = sphi 0, %s131
    %s135 = sphi 0, %s134
    %s151 = sphi 0, %s135
  $region4: #{tpu_custom_call.1} parent=0 // loop_header_branch
    %14 = sbr.rel (%p12) target = $region8
  $region5: #{tpu_custom_call.1} parent=0 // loop_body
    %s16 = ssub.s32 %s11, 1
    %s17 = ssub.s32 %s11, 2
    %s18 = sadd.s32 %s11, 1
    %s19 = ssub.s32 %s11, %s18
    %p20 = scmp.eq.s32.totalorder %s19, 0
    %s22 = sadd.s32 %s21, 1
    %s23 = scalar_select %p20, %s21, %s22
    %p26 = pneg %p20
    %p27 = scmp.eq.s32.totalorder %s11, 1
    %p28 = por %p26, %p27
    %p29 = scmp.ne.s32.totalorder %s21, %s24
    %p30 = scmp.eq.s32.totalorder %s11, 0
    %p31 = por %p29, %p30
    %p32 = scmp.ne.s32.totalorder %s21, %s24
    %p33 = scmp.eq.s32.totalorder %s16, 1
    %p34 = por %p32, %p33
    %p35 = scmp.ne.s32.totalorder %s24, %s25
    %p36 = scmp.eq.s32.totalorder %s16, 0
    %p37 = por %p35, %p36
    %p38 = scmp.ne.s32.totalorder %s24, %s25
    %p39 = scmp.eq.s32.totalorder %s17, 1
    %p40 = por %p38, %p39
    %p42 = scmp.ne.s32.totalorder %s25, %s41
    %p43 = scmp.eq.s32.totalorder %s17, 0
    %p44 = por %p42, %p43
    %s46 = sadd.s32 %s45, 1
    %p49 = scmp.eq.s32.totalorder %s11, 1
    %p50 = scmp.ne.s32.totalorder %s45, %s47
    %p51 = scmp.eq.s32.totalorder %s11, 0
    %p52 = por %p50, %p51
    %p53 = scmp.ne.s32.totalorder %s45, %s47
    %p54 = scmp.eq.s32.totalorder %s16, 1
    %p55 = por %p53, %p54
    %p56 = scmp.ne.s32.totalorder %s47, %s48
    %p57 = scmp.eq.s32.totalorder %s16, 0
    %p58 = por %p56, %p57
    %p59 = scmp.ne.s32.totalorder %s47, %s48
    %p60 = scmp.eq.s32.totalorder %s17, 1
    %p61 = por %p59, %p60
    %p63 = scmp.ne.s32.totalorder %s48, %s62
    %p64 = scmp.eq.s32.totalorder %s17, 0
    %p65 = por %p63, %p64
    %s67 = sadd.s32 %s66, 1
    %p70 = scmp.eq.s32.totalorder %s11, 1
    %p71 = scmp.ne.s32.totalorder %s66, %s68
    %p72 = scmp.eq.s32.totalorder %s11, 0
    %p73 = por %p71, %p72
    %p74 = scmp.ne.s32.totalorder %s66, %s68
    %p75 = scmp.eq.s32.totalorder %s16, 1
    %p76 = por %p74, %p75
    %p77 = scmp.ne.s32.totalorder %s68, %s69
    %p78 = scmp.eq.s32.totalorder %s16, 0
    %p79 = por %p77, %p78
    %p80 = scmp.ne.s32.totalorder %s68, %s69
    %p81 = scmp.eq.s32.totalorder %s17, 1
    %p82 = por %p80, %p81
    %p84 = scmp.ne.s32.totalorder %s69, %s83
    %p85 = scmp.eq.s32.totalorder %s17, 0
    %p86 = por %p84, %p85
    %s88 = sadd.s32 %s87, 1
    %p91 = scmp.eq.s32.totalorder %s11, 1
    %p92 = scmp.ne.s32.totalorder %s87, %s89
    %p93 = scmp.eq.s32.totalorder %s11, 0
    %p94 = por %p92, %p93
    %p95 = scmp.ne.s32.totalorder %s87, %s89
    %p96 = scmp.eq.s32.totalorder %s16, 1
    %p97 = por %p95, %p96
    %p98 = scmp.ne.s32.totalorder %s89, %s90
    %p99 = scmp.eq.s32.totalorder %s16, 0
    %p100 = por %p98, %p99
    %p101 = scmp.ne.s32.totalorder %s89, %s90
    %p102 = scmp.eq.s32.totalorder %s17, 1
    %p103 = por %p101, %p102
    %p105 = scmp.ne.s32.totalorder %s90, %s104
    %p106 = scmp.eq.s32.totalorder %s17, 0
    %p107 = por %p105, %p106
    %s109 = sadd.s32 %s108, 1
    %p112 = scmp.eq.s32.totalorder %s11, 1
    %p113 = scmp.ne.s32.totalorder %s108, %s110
    %p114 = scmp.eq.s32.totalorder %s11, 0
    %p115 = por %p113, %p114
    %p116 = scmp.ne.s32.totalorder %s108, %s110
    %p117 = scmp.eq.s32.totalorder %s16, 1
    %p118 = por %p116, %p117
    %p119 = scmp.ne.s32.totalorder %s110, %s111
    %p120 = scmp.eq.s32.totalorder %s16, 0
    %p121 = por %p119, %p120
    %p122 = scmp.ne.s32.totalorder %s110, %s111
    %p123 = scmp.eq.s32.totalorder %s17, 1
    %p124 = por %p122, %p123
    %p126 = scmp.ne.s32.totalorder %s111, %s125
    %p127 = scmp.eq.s32.totalorder %s17, 0
    %p128 = por %p126, %p127
    %s129 = ssub.s32 %s11, %s18
    %p130 = scmp.eq.s32.totalorder %s129, 0
    %s132 = sadd.s32 %s131, 1
    %s133 = scalar_select %p130, %s131, %s132
    %p136 = pneg %p130
    %p137 = scmp.eq.s32.totalorder %s11, 1
    %p138 = por %p136, %p137
    %p139 = scmp.ne.s32.totalorder %s131, %s134
    %p140 = scmp.eq.s32.totalorder %s11, 0
    %p141 = por %p139, %p140
    %p142 = scmp.ne.s32.totalorder %s131, %s134
    %p143 = scmp.eq.s32.totalorder %s16, 1
    %p144 = por %p142, %p143
    %p145 = scmp.ne.s32.totalorder %s134, %s135
    %p146 = scmp.eq.s32.totalorder %s16, 0
    %p147 = por %p145, %p146
    %p148 = scmp.ne.s32.totalorder %s134, %s135
    %p149 = scmp.eq.s32.totalorder %s17, 1
    %p150 = por %p148, %p149
    %p152 = scmp.ne.s32.totalorder %s135, %s151
    %p153 = scmp.eq.s32.totalorder %s17, 0
    %p154 = por %p152, %p153
    %p155 = scmp.le.s32.totalorder 1, %s11
    %p156 = scmp.lt.s32.totalorder %s11, 3
    %p157 = pnand %p155, %p156
    %p158 = pneg %p157
    // Predicated region
    $region9: #{tpu_custom_call.1} parent=5 // pred_check
      _
    $region10: #{tpu_custom_call.1} parent=5 // pred_check_branch
      %160 = sbr.rel (%p157) target = $region12
    $region11: #{tpu_custom_call.1} parent=5 // pred_region
      %s161 = ssub.s32 %s11, 1
      // Predicated region
      $region13: #{tpu_custom_call.1} parent=11 // pred_check
        %p162 = pneg %p58
      $region14: #{tpu_custom_call.1} parent=11 // pred_check_branch
        %164 = sbr.rel (%p162) target = $region16
      $region15: #{tpu_custom_call.1} parent=11 // pred_region
        _
      $region16: #{tpu_custom_call.1} parent=11 // pred_fallthru
        _
      // Predicated region
      $region17: #{tpu_custom_call.1} parent=11 // pred_check
        %p165 = pneg %p79
      $region18: #{tpu_custom_call.1} parent=11 // pred_check_branch
        %167 = sbr.rel (%p165) target = $region20
      $region19: #{tpu_custom_call.1} parent=11 // pred_region
        _
      $region20: #{tpu_custom_call.1} parent=11 // pred_fallthru
        _
      // Predicated region
      $region21: #{tpu_custom_call.1} parent=11 // pred_check
        %p168 = pneg %p100
      $region22: #{tpu_custom_call.1} parent=11 // pred_check_branch
        %170 = sbr.rel (%p168) target = $region24
      $region23: #{tpu_custom_call.1} parent=11 // pred_region
        _
      $region24: #{tpu_custom_call.1} parent=11 // pred_fallthru
        _
      // Predicated region
      $region25: #{tpu_custom_call.1} parent=11 // pred_check
        %p171 = pneg %p121
      $region26: #{tpu_custom_call.1} parent=11 // pred_check_branch
        %173 = sbr.rel (%p171) target = $region28
      $region27: #{tpu_custom_call.1} parent=11 // pred_region
        _
      $region28: #{tpu_custom_call.1} parent=11 // pred_fallthru
        _
    $region12: #{tpu_custom_call.1} parent=5 // pred_fallthru
      _
    %p174 = scmp.lt.s32.totalorder %s11, 2
    // Predicated region
    $region29: #{tpu_custom_call.1} parent=5 // pred_check
      %p175 = pneg %p174
    $region30: #{tpu_custom_call.1} parent=5 // pred_check_branch
      %177 = sbr.rel (%p175) target = $region32
    $region31: #{tpu_custom_call.1} parent=5 // pred_region
      // Predicated region
      $region33: #{tpu_custom_call.1} parent=31 // pred_check
        %p178 = pneg %p31
      $region34: #{tpu_custom_call.1} parent=31 // pred_check_branch
        %180 = sbr.rel (%p178) target = $region36
      $region35: #{tpu_custom_call.1} parent=31 // pred_region
        %p181 = scmp.lt.s32.totalorder %s11, 1
        %s182 = scalar_select %p181, %s11, 1
        %s183 = smul.addr %s182, 8
        %s184 = smul.addr %s183, 8
        %s185 = scalar_lea.vmem %s0, %s184
      $region36: #{tpu_custom_call.1} parent=31 // pred_fallthru
        _
    $region32: #{tpu_custom_call.1} parent=5 // pred_fallthru
      _
    %p186 = scmp.le.s32.totalorder 1, %s11
    %p187 = scmp.lt.s32.totalorder %s11, 3
    %p188 = pnand %p186, %p187
    %p189 = pneg %p188
    // Predicated region
    $region37: #{tpu_custom_call.1} parent=5 // pred_check
      _
    $region38: #{tpu_custom_call.1} parent=5 // pred_check_branch
      %191 = sbr.rel (%p188) target = $region40
    $region39: #{tpu_custom_call.1} parent=5 // pred_region
      %s192 = ssub.s32 %s11, 1
      %p193 = scmp.lt.s32.totalorder %s16, 1
      %s194 = scalar_select %p193, %s16, 1
      %s195 = smul.addr %s194, 8
      %s196 = smul.addr %s195, 8
      %s197 = scalar_lea.vmem %s0, %s196
      %p198 = pneg %p37
      %p199 = pneg %p34
      %p200 = pneg %p58
      %p201 = pneg %p55
      %p202 = pneg %p79
      %p203 = pneg %p76
      %p204 = pneg %p100
      %p205 = pneg %p97
      %p206 = pneg %p121
      %p207 = pneg %p118
      %p208 = pneg %p147
      %p209 = pneg %p144
      %p210 = scmp.lt.s32.totalorder %s16, 1
      %s211 = scalar_select %p210, %s16, 1
      %s212 = smul.addr %s211, 8
      %s213 = smul.addr %s212, 8
      %s214 = scalar_lea.vmem %s5, %s213
      %p215 = scmp.lt.s32.totalorder %s16, 1
      %s216 = scalar_select %p215, %s16, 1
      %s217 = smul.addr %s216, 8
      %s218 = smul.addr %s217, 8
      %s219 = scalar_lea.vmem %s0, %s218
      %p220 = scmp.lt.s32.totalorder %s16, 1
      %s221 = scalar_select %p220, %s16, 1
      %s222 = smul.addr %s221, 8
      %s223 = smul.addr %s222, 8
      %s224 = scalar_lea.vmem %s5, %s223
      %vm225 = vcmask 31744
      %226 = vst.msk [vmem:[#allocation2] sm:$0xff] %vm225, 0.0
      %vm227 = vcmask 25600
      %228 = vst.msk [vmem:[#allocation2 + $0x8] sm:$0x3] %vm227, 0.0
      %s229 = scalar_lea.vmem [#allocation2], 144
      %230 = vst.msk [vmem:[%s229] sm:$0xff] %vm225, 0.0
      %231 = vst.msk [vmem:[%s229 + $0x8] sm:$0x3] %vm227, 0.0
      %s232 = scalar_lea.vmem [#allocation2], 16
      %vm233 = vcmask 24576
      %234 = vst.msk [vmem:[%s232] sm:$0x1] %vm233, 0.0
      %235 = vst.msk [vmem:[%s232 + $0x10] sm:$0x1] %vm233, 0.0
      %236 = vst.msk [vmem:[%s232 + $0x20] sm:$0x1] %vm233, 0.0
      %237 = vst.msk [vmem:[%s232 + $0x30] sm:$0x1] %vm233, 0.0
      %238 = vst.msk [vmem:[%s232 + $0x40] sm:$0x1] %vm233, 0.0
      %239 = vst.msk [vmem:[%s232 + $0x50] sm:$0x1] %vm233, 0.0
      %240 = vst.msk [vmem:[%s232 + $0x60] sm:$0x1] %vm233, 0.0
      %241 = vst.msk [vmem:[%s232 + $0x70] sm:$0x1] %vm233, 0.0
      %242 = vst.msk [vmem:[%s232 + $0x9] sm:$0x1] %vm233, 0.0
      %243 = vst.msk [vmem:[%s232 + $0x19] sm:$0x1] %vm233, 0.0
      %244 = vst.msk [vmem:[%s232 + $0x29] sm:$0x1] %vm233, 0.0
      %245 = vst.msk [vmem:[%s232 + $0x39] sm:$0x1] %vm233, 0.0
      %246 = vst.msk [vmem:[%s232 + $0x49] sm:$0x1] %vm233, 0.0
      %247 = vst.msk [vmem:[%s232 + $0x59] sm:$0x1] %vm233, 0.0
      %248 = vst.msk [vmem:[%s232 + $0x69] sm:$0x1] %vm233, 0.0
      %249 = vst.msk [vmem:[%s232 + $0x79] sm:$0x1] %vm233, 0.0
      %v250 = vld [vmem:[%s219] sm:$0xff]
      %v251 = vld [vmem:[%s219 + $0x8] sm:$0xff]
      %v252 = vld [vmem:[%s219 + $0x10] sm:$0xff]
      %v253 = vld [vmem:[%s219 + $0x18] sm:$0xff]
      %v254 = vld [vmem:[%s219 + $0x20] sm:$0xff]
      %v255 = vld [vmem:[%s219 + $0x28] sm:$0xff]
      %v256 = vld [vmem:[%s219 + $0x30] sm:$0xff]
      %v257 = vld [vmem:[%s219 + $0x38] sm:$0xff]
      %258 = vst.msk [vmem:[%s232 + $0x1] sm:$0xff] %vm225, %v250
      %259 = vst.msk [vmem:[%s232 + $0x11] sm:$0xff] %vm225, %v251
      %260 = vst.msk [vmem:[%s232 + $0x21] sm:$0xff] %vm225, %v252
      %261 = vst.msk [vmem:[%s232 + $0x31] sm:$0xff] %vm225, %v253
      %262 = vst.msk [vmem:[%s232 + $0x41] sm:$0xff] %vm225, %v254
      %263 = vst.msk [vmem:[%s232 + $0x51] sm:$0xff] %vm225, %v255
      %264 = vst.msk [vmem:[%s232 + $0x61] sm:$0xff] %vm225, %v256
      %265 = vst.msk [vmem:[%s232 + $0x71] sm:$0xff] %vm225, %v257
      %v266 = vld [vmem:[%s1] sm:$0xff]
      %v267 = vld [vmem:[%s1 + $0x8] sm:$0x1]
      %v268 = vld [vmem:[%s1 + $0x10] sm:$0xff]
      %v269 = vld [vmem:[%s1 + $0x18] sm:$0x1]
      %v270 = vld [vmem:[%s1 + $0x20] sm:$0xff]
      %v271 = vld [vmem:[%s1 + $0x28] sm:$0x1]
      %v272 = vld [vmem:[%s2] sm:$0x7]
      %v273 = vld [vmem:[%s3] sm:$0xff]
      %v274 = vld [vmem:[%s3 + $0x8] sm:$0xf]
      %v275 = vld [vmem:[%s4] sm:$0x1]
      %v276 = vld [vmem:[#allocation2] sm:$0xff]
      %v277 = vld [vmem:[#allocation2 + $0x10] sm:$0xff]
      %v278 = vld [vmem:[#allocation2 + $0x20] sm:$0xff]
      %v279 = vld [vmem:[#allocation2 + $0x30] sm:$0xff]
      %v280 = vld [vmem:[#allocation2 + $0x40] sm:$0xff]
      %v281 = vld [vmem:[#allocation2 + $0x50] sm:$0xff]
      %v282 = vld [vmem:[#allocation2 + $0x60] sm:$0xff]
      %v283 = vld [vmem:[#allocation2 + $0x70] sm:$0xff]
      %v284 = vlaneseq
      %v285 = vshrl.u32 %v284, 7
      %v286 = vsub.s32 0, %v285
      %v287 = vrot.slane %v266, %v286
      %v288 = vmul.f32 %v276, %v287
      %v289 = vmul.f32 %v277, %v287
      %v290 = vmul.f32 %v278, %v287
      %v291 = vmul.f32 %v279, %v287
      %v292 = vmul.f32 %v280, %v287
      %v293 = vmul.f32 %v281, %v287
      %v294 = vmul.f32 %v282, %v287
      %v295 = vmul.f32 %v283, %v287
      %v296 = vlaneseq
      %v297 = vshrl.u32 %v296, 7
      %v298 = vsub.s32 0, %v297
      %v299 = vrot.slane %v268, %v298
      %v300 = vmul.f32 %v276, %v299
      %v301 = vmul.f32 %v277, %v299
      %v302 = vmul.f32 %v278, %v299
      %v303 = vmul.f32 %v279, %v299
      %v304 = vmul.f32 %v280, %v299
      %v305 = vmul.f32 %v281, %v299
      %v306 = vmul.f32 %v282, %v299
      %v307 = vmul.f32 %v283, %v299
      %v308 = vlaneseq
      %v309 = vshrl.u32 %v308, 7
      %v310 = vsub.s32 0, %v309
      %v311 = vrot.slane %v270, %v310
      %v312 = vmul.f32 %v276, %v311
      %v313 = vmul.f32 %v277, %v311
      %v314 = vmul.f32 %v278, %v311
      %v315 = vmul.f32 %v279, %v311
      %v316 = vmul.f32 %v280, %v311
      %v317 = vmul.f32 %v281, %v311
      %v318 = vmul.f32 %v282, %v311
      %v319 = vmul.f32 %v283, %v311
      %v320 = vld [vmem:[#allocation2 + $0x1] sm:$0xff]
      %v321 = vld [vmem:[#allocation2 + $0x11] sm:$0xff]
      %v322 = vld [vmem:[#allocation2 + $0x21] sm:$0xff]
      %v323 = vld [vmem:[#allocation2 + $0x31] sm:$0xff]
      %v324 = vld [vmem:[#allocation2 + $0x41] sm:$0xff]
      %v325 = vld [vmem:[#allocation2 + $0x51] sm:$0xff]
      %v326 = vld [vmem:[#allocation2 + $0x61] sm:$0xff]
      %v327 = vld [vmem:[#allocation2 + $0x71] sm:$0xff]
      %v328 = vlaneseq
      %v329 = vshrl.u32 %v328, 7
      %v330 = vsub.s32 1, %v329
      %v331 = vrot.slane %v266, %v330
      %v332 = vmul.f32 %v320, %v331
      %v333 = vmul.f32 %v321, %v331
      %v334 = vmul.f32 %v322, %v331
      %v335 = vmul.f32 %v323, %v331
      %v336 = vmul.f32 %v324, %v331
      %v337 = vmul.f32 %v325, %v331
      %v338 = vmul.f32 %v326, %v331
      %v339 = vmul.f32 %v327, %v331
      %v340 = vadd.f32 %v288, %v332
      %v341 = vadd.f32 %v289, %v333
      %v342 = vadd.f32 %v290, %v334
      %v343 = vadd.f32 %v291, %v335
      %v344 = vadd.f32 %v292, %v336
      %v345 = vadd.f32 %v293, %v337
      %v346 = vadd.f32 %v294, %v338
      %v347 = vadd.f32 %v295, %v339
      %v348 = vlaneseq
      %v349 = vshrl.u32 %v348, 7
      %v350 = vsub.s32 1, %v349
      %v351 = vrot.slane %v268, %v350
      %v352 = vmul.f32 %v320, %v351
      %v353 = vmul.f32 %v321, %v351
      %v354 = vmul.f32 %v322, %v351
      %v355 = vmul.f32 %v323, %v351
      %v356 = vmul.f32 %v324, %v351
      %v357 = vmul.f32 %v325, %v351
      %v358 = vmul.f32 %v326, %v351
      %v359 = vmul.f32 %v327, %v351
      %v360 = vadd.f32 %v300, %v352
      %v361 = vadd.f32 %v301, %v353
      %v362 = vadd.f32 %v302, %v354
      %v363 = vadd.f32 %v303, %v355
      %v364 = vadd.f32 %v304, %v356
      %v365 = vadd.f32 %v305, %v357
      %v366 = vadd.f32 %v306, %v358
      %v367 = vadd.f32 %v307, %v359
      %v368 = vlaneseq
      %v369 = vshrl.u32 %v368, 7
      %v370 = vsub.s32 1, %v369
      %v371 = vrot.slane %v270, %v370
      %v372 = vmul.f32 %v320, %v371
      %v373 = vmul.f32 %v321, %v371
      %v374 = vmul.f32 %v322, %v371
      %v375 = vmul.f32 %v323, %v371
      %v376 = vmul.f32 %v324, %v371
      %v377 = vmul.f32 %v325, %v371
      %v378 = vmul.f32 %v326, %v371
      %v379 = vmul.f32 %v327, %v371
      %v380 = vadd.f32 %v312, %v372
      %v381 = vadd.f32 %v313, %v373
      %v382 = vadd.f32 %v314, %v374
      %v383 = vadd.f32 %v315, %v375
      %v384 = vadd.f32 %v316, %v376
      %v385 = vadd.f32 %v317, %v377
      %v386 = vadd.f32 %v318, %v378
      %v387 = vadd.f32 %v319, %v379
      %v388 = vld [vmem:[#allocation2 + $0x2] sm:$0xff]
      %v389 = vld [vmem:[#allocation2 + $0x12] sm:$0xff]
      %v390 = vld [vmem:[#allocation2 + $0x22] sm:$0xff]
      %v391 = vld [vmem:[#allocation2 + $0x32] sm:$0xff]
      %v392 = vld [vmem:[#allocation2 + $0x42] sm:$0xff]
      %v393 = vld [vmem:[#allocation2 + $0x52] sm:$0xff]
      %v394 = vld [vmem:[#allocation2 + $0x62] sm:$0xff]
      %v395 = vld [vmem:[#allocation2 + $0x72] sm:$0xff]
      %v396 = vlaneseq
      %v397 = vshrl.u32 %v396, 7
      %v398 = vsub.s32 2, %v397
      %v399 = vrot.slane %v266, %v398
      %v400 = vmul.f32 %v388, %v399
      %v401 = vmul.f32 %v389, %v399
      %v402 = vmul.f32 %v390, %v399
      %v403 = vmul.f32 %v391, %v399
      %v404 = vmul.f32 %v392, %v399
      %v405 = vmul.f32 %v393, %v399
      %v406 = vmul.f32 %v394, %v399
      %v407 = vmul.f32 %v395, %v399
      %v408 = vadd.f32 %v340, %v400
      %v409 = vadd.f32 %v341, %v401
      %v410 = vadd.f32 %v342, %v402
      %v411 = vadd.f32 %v343, %v403
      %v412 = vadd.f32 %v344, %v404
      %v413 = vadd.f32 %v345, %v405
      %v414 = vadd.f32 %v346, %v406
      %v415 = vadd.f32 %v347, %v407
      %v416 = vlaneseq
      %v417 = vshrl.u32 %v416, 7
      %v418 = vsub.s32 2, %v417
      %v419 = vrot.slane %v268, %v418
      %v420 = vmul.f32 %v388, %v419
      %v421 = vmul.f32 %v389, %v419
      %v422 = vmul.f32 %v390, %v419
      %v423 = vmul.f32 %v391, %v419
      %v424 = vmul.f32 %v392, %v419
      %v425 = vmul.f32 %v393, %v419
      %v426 = vmul.f32 %v394, %v419
      %v427 = vmul.f32 %v395, %v419
      %v428 = vadd.f32 %v360, %v420
      %v429 = vadd.f32 %v361, %v421
      %v430 = vadd.f32 %v362, %v422
      %v431 = vadd.f32 %v363, %v423
      %v432 = vadd.f32 %v364, %v424
      %v433 = vadd.f32 %v365, %v425
      %v434 = vadd.f32 %v366, %v426
      %v435 = vadd.f32 %v367, %v427
      %v436 = vlaneseq
      %v437 = vshrl.u32 %v436, 7
      %v438 = vsub.s32 2, %v437
      %v439 = vrot.slane %v270, %v438
      %v440 = vmul.f32 %v388, %v439
      %v441 = vmul.f32 %v389, %v439
      %v442 = vmul.f32 %v390, %v439
      %v443 = vmul.f32 %v391, %v439
      %v444 = vmul.f32 %v392, %v439
      %v445 = vmul.f32 %v393, %v439
      %v446 = vmul.f32 %v394, %v439
      %v447 = vmul.f32 %v395, %v439
      %v448 = vadd.f32 %v380, %v440
      %v449 = vadd.f32 %v381, %v441
      %v450 = vadd.f32 %v382, %v442
      %v451 = vadd.f32 %v383, %v443
      %v452 = vadd.f32 %v384, %v444
      %v453 = vadd.f32 %v385, %v445
      %v454 = vadd.f32 %v386, %v446
      %v455 = vadd.f32 %v387, %v447
      %v456 = vld [vmem:[%s232] sm:$0xff]
      %v457 = vld [vmem:[%s232 + $0x10] sm:$0xff]
      %v458 = vld [vmem:[%s232 + $0x20] sm:$0xff]
      %v459 = vld [vmem:[%s232 + $0x30] sm:$0xff]
      %v460 = vld [vmem:[%s232 + $0x40] sm:$0xff]
      %v461 = vld [vmem:[%s232 + $0x50] sm:$0xff]
      %v462 = vld [vmem:[%s232 + $0x60] sm:$0xff]
      %v463 = vld [vmem:[%s232 + $0x70] sm:$0xff]
      %v464 = vlaneseq
      %v465 = vshrl.u32 %v464, 7
      %v466 = vsub.s32 3, %v465
      %v467 = vrot.slane %v266, %v466
      %v468 = vmul.f32 %v456, %v467
      %v469 = vmul.f32 %v457, %v467
      %v470 = vmul.f32 %v458, %v467
      %v471 = vmul.f32 %v459, %v467
      %v472 = vmul.f32 %v460, %v467
      %v473 = vmul.f32 %v461, %v467
      %v474 = vmul.f32 %v462, %v467
      %v475 = vmul.f32 %v463, %v467
      %v476 = vadd.f32 %v408, %v468
      %v477 = vadd.f32 %v409, %v469
      %v478 = vadd.f32 %v410, %v470
      %v479 = vadd.f32 %v411, %v471
      %v480 = vadd.f32 %v412, %v472
      %v481 = vadd.f32 %v413, %v473
      %v482 = vadd.f32 %v414, %v474
      %v483 = vadd.f32 %v415, %v475
      %v484 = vlaneseq
      %v485 = vshrl.u32 %v484, 7
      %v486 = vsub.s32 3, %v485
      %v487 = vrot.slane %v268, %v486
      %v488 = vmul.f32 %v456, %v487
      %v489 = vmul.f32 %v457, %v487
      %v490 = vmul.f32 %v458, %v487
      %v491 = vmul.f32 %v459, %v487
      %v492 = vmul.f32 %v460, %v487
      %v493 = vmul.f32 %v461, %v487
      %v494 = vmul.f32 %v462, %v487
      %v495 = vmul.f32 %v463, %v487
      %v496 = vadd.f32 %v428, %v488
      %v497 = vadd.f32 %v429, %v489
      %v498 = vadd.f32 %v430, %v490
      %v499 = vadd.f32 %v431, %v491
      %v500 = vadd.f32 %v432, %v492
      %v501 = vadd.f32 %v433, %v493
      %v502 = vadd.f32 %v434, %v494
      %v503 = vadd.f32 %v435, %v495
      %v504 = vlaneseq
      %v505 = vshrl.u32 %v504, 7
      %v506 = vsub.s32 3, %v505
      %v507 = vrot.slane %v270, %v506
      %v508 = vmul.f32 %v456, %v507
      %v509 = vmul.f32 %v457, %v507
      %v510 = vmul.f32 %v458, %v507
      %v511 = vmul.f32 %v459, %v507
      %v512 = vmul.f32 %v460, %v507
      %v513 = vmul.f32 %v461, %v507
      %v514 = vmul.f32 %v462, %v507
      %v515 = vmul.f32 %v463, %v507
      %v516 = vadd.f32 %v448, %v508
      %v517 = vadd.f32 %v449, %v509
      %v518 = vadd.f32 %v450, %v510
      %v519 = vadd.f32 %v451, %v511
      %v520 = vadd.f32 %v452, %v512
      %v521 = vadd.f32 %v453, %v513
      %v522 = vadd.f32 %v454, %v514
      %v523 = vadd.f32 %v455, %v515
      %v524 = vld [vmem:[%s232 + $0x1] sm:$0xff]
      %v525 = vld [vmem:[%s232 + $0x11] sm:$0xff]
      %v526 = vld [vmem:[%s232 + $0x21] sm:$0xff]
      %v527 = vld [vmem:[%s232 + $0x31] sm:$0xff]
      %v528 = vld [vmem:[%s232 + $0x41] sm:$0xff]
      %v529 = vld [vmem:[%s232 + $0x51] sm:$0xff]
      %v530 = vld [vmem:[%s232 + $0x61] sm:$0xff]
      %v531 = vld [vmem:[%s232 + $0x71] sm:$0xff]
      %v532 = vlaneseq
      %v533 = vshrl.u32 %v532, 7
      %v534 = vsub.s32 4, %v533
      %v535 = vrot.slane %v266, %v534
      %v536 = vmul.f32 %v524, %v535
      %v537 = vmul.f32 %v525, %v535
      %v538 = vmul.f32 %v526, %v535
      %v539 = vmul.f32 %v527, %v535
      %v540 = vmul.f32 %v528, %v535
      %v541 = vmul.f32 %v529, %v535
      %v542 = vmul.f32 %v530, %v535
      %v543 = vmul.f32 %v531, %v535
      %v544 = vadd.f32 %v476, %v536
      %v545 = vadd.f32 %v477, %v537
      %v546 = vadd.f32 %v478, %v538
      %v547 = vadd.f32 %v479, %v539
      %v548 = vadd.f32 %v480, %v540
      %v549 = vadd.f32 %v481, %v541
      %v550 = vadd.f32 %v482, %v542
      %v551 = vadd.f32 %v483, %v543
      %v552 = vlaneseq
      %v553 = vshrl.u32 %v552, 7
      %v554 = vsub.s32 4, %v553
      %v555 = vrot.slane %v268, %v554
      %v556 = vmul.f32 %v524, %v555
      %v557 = vmul.f32 %v525, %v555
      %v558 = vmul.f32 %v526, %v555
      %v559 = vmul.f32 %v527, %v555
      %v560 = vmul.f32 %v528, %v555
      %v561 = vmul.f32 %v529, %v555
      %v562 = vmul.f32 %v530, %v555
      %v563 = vmul.f32 %v531, %v555
      %v564 = vadd.f32 %v496, %v556
      %v565 = vadd.f32 %v497, %v557
      %v566 = vadd.f32 %v498, %v558
      %v567 = vadd.f32 %v499, %v559
      %v568 = vadd.f32 %v500, %v560
      %v569 = vadd.f32 %v501, %v561
      %v570 = vadd.f32 %v502, %v562
      %v571 = vadd.f32 %v503, %v563
      %v572 = vlaneseq
      %v573 = vshrl.u32 %v572, 7
      %v574 = vsub.s32 4, %v573
      %v575 = vrot.slane %v270, %v574
      %v576 = vmul.f32 %v524, %v575
      %v577 = vmul.f32 %v525, %v575
      %v578 = vmul.f32 %v526, %v575
      %v579 = vmul.f32 %v527, %v575
      %v580 = vmul.f32 %v528, %v575
      %v581 = vmul.f32 %v529, %v575
      %v582 = vmul.f32 %v530, %v575
      %v583 = vmul.f32 %v531, %v575
      %v584 = vadd.f32 %v516, %v576
      %v585 = vadd.f32 %v517, %v577
      %v586 = vadd.f32 %v518, %v578
      %v587 = vadd.f32 %v519, %v579
      %v588 = vadd.f32 %v520, %v580
      %v589 = vadd.f32 %v521, %v581
      %v590 = vadd.f32 %v522, %v582
      %v591 = vadd.f32 %v523, %v583
      %v592 = vld [vmem:[%s232 + $0x2] sm:$0xff]
      %v593 = vld [vmem:[%s232 + $0x12] sm:$0xff]
      %v594 = vld [vmem:[%s232 + $0x22] sm:$0xff]
      %v595 = vld [vmem:[%s232 + $0x32] sm:$0xff]
      %v596 = vld [vmem:[%s232 + $0x42] sm:$0xff]
      %v597 = vld [vmem:[%s232 + $0x52] sm:$0xff]
      %v598 = vld [vmem:[%s232 + $0x62] sm:$0xff]
      %v599 = vld [vmem:[%s232 + $0x72] sm:$0xff]
      %v600 = vlaneseq
      %v601 = vshrl.u32 %v600, 7
      %v602 = vsub.s32 5, %v601
      %v603 = vrot.slane %v266, %v602
      %v604 = vmul.f32 %v592, %v603
      %v605 = vmul.f32 %v593, %v603
      %v606 = vmul.f32 %v594, %v603
      %v607 = vmul.f32 %v595, %v603
      %v608 = vmul.f32 %v596, %v603
      %v609 = vmul.f32 %v597, %v603
      %v610 = vmul.f32 %v598, %v603
      %v611 = vmul.f32 %v599, %v603
      %v612 = vadd.f32 %v544, %v604
      %v613 = vadd.f32 %v545, %v605
      %v614 = vadd.f32 %v546, %v606
      %v615 = vadd.f32 %v547, %v607
      %v616 = vadd.f32 %v548, %v608
      %v617 = vadd.f32 %v549, %v609
      %v618 = vadd.f32 %v550, %v610
      %v619 = vadd.f32 %v551, %v611
      %v620 = vlaneseq
      %v621 = vshrl.u32 %v620, 7
      %v622 = vsub.s32 5, %v621
      %v623 = vrot.slane %v268, %v622
      %v624 = vmul.f32 %v592, %v623
      %v625 = vmul.f32 %v593, %v623
      %v626 = vmul.f32 %v594, %v623
      %v627 = vmul.f32 %v595, %v623
      %v628 = vmul.f32 %v596, %v623
      %v629 = vmul.f32 %v597, %v623
      %v630 = vmul.f32 %v598, %v623
      %v631 = vmul.f32 %v599, %v623
      %v632 = vadd.f32 %v564, %v624
      %v633 = vadd.f32 %v565, %v625
      %v634 = vadd.f32 %v566, %v626
      %v635 = vadd.f32 %v567, %v627
      %v636 = vadd.f32 %v568, %v628
      %v637 = vadd.f32 %v569, %v629
      %v638 = vadd.f32 %v570, %v630
      %v639 = vadd.f32 %v571, %v631
      %v640 = vlaneseq
      %v641 = vshrl.u32 %v640, 7
      %v642 = vsub.s32 5, %v641
      %v643 = vrot.slane %v270, %v642
      %v644 = vmul.f32 %v592, %v643
      %v645 = vmul.f32 %v593, %v643
      %v646 = vmul.f32 %v594, %v643
      %v647 = vmul.f32 %v595, %v643
      %v648 = vmul.f32 %v596, %v643
      %v649 = vmul.f32 %v597, %v643
      %v650 = vmul.f32 %v598, %v643
      %v651 = vmul.f32 %v599, %v643
      %v652 = vadd.f32 %v584, %v644
      %v653 = vadd.f32 %v585, %v645
      %v654 = vadd.f32 %v586, %v646
      %v655 = vadd.f32 %v587, %v647
      %v656 = vadd.f32 %v588, %v648
      %v657 = vadd.f32 %v589, %v649
      %v658 = vadd.f32 %v590, %v650
      %v659 = vadd.f32 %v591, %v651
      %s660 = scalar_lea.vmem [#allocation2], 32
      %v661 = vld [vmem:[%s660] sm:$0xff]
      %v662 = vld [vmem:[%s660 + $0x10] sm:$0xff]
      %v663 = vld [vmem:[%s660 + $0x20] sm:$0xff]
      %v664 = vld [vmem:[%s660 + $0x30] sm:$0xff]
      %v665 = vld [vmem:[%s660 + $0x40] sm:$0xff]
      %v666 = vld [vmem:[%s660 + $0x50] sm:$0xff]
      %v667 = vld [vmem:[%s660 + $0x60] sm:$0xff]
      %v668 = vld [vmem:[%s660 + $0x70] sm:$0xff]
      %v669 = vlaneseq
      %v670 = vshrl.u32 %v669, 7
      %v671 = vsub.s32 6, %v670
      %v672 = vrot.slane %v266, %v671
      %v673 = vmul.f32 %v661, %v672
      %v674 = vmul.f32 %v662, %v672
      %v675 = vmul.f32 %v663, %v672
      %v676 = vmul.f32 %v664, %v672
      %v677 = vmul.f32 %v665, %v672
      %v678 = vmul.f32 %v666, %v672
      %v679 = vmul.f32 %v667, %v672
      %v680 = vmul.f32 %v668, %v672
      %v681 = vadd.f32 %v612, %v673
      %v682 = vadd.f32 %v613, %v674
      %v683 = vadd.f32 %v614, %v675
      %v684 = vadd.f32 %v615, %v676
      %v685 = vadd.f32 %v616, %v677
      %v686 = vadd.f32 %v617, %v678
      %v687 = vadd.f32 %v618, %v679
      %v688 = vadd.f32 %v619, %v680
      %v689 = vlaneseq
      %v690 = vshrl.u32 %v689, 7
      %v691 = vsub.s32 6, %v690
      %v692 = vrot.slane %v268, %v691
      %v693 = vmul.f32 %v661, %v692
      %v694 = vmul.f32 %v662, %v692
      %v695 = vmul.f32 %v663, %v692
      %v696 = vmul.f32 %v664, %v692
      %v697 = vmul.f32 %v665, %v692
      %v698 = vmul.f32 %v666, %v692
      %v699 = vmul.f32 %v667, %v692
      %v700 = vmul.f32 %v668, %v692
      %v701 = vadd.f32 %v632, %v693
      %v702 = vadd.f32 %v633, %v694
      %v703 = vadd.f32 %v634, %v695
      %v704 = vadd.f32 %v635, %v696
      %v705 = vadd.f32 %v636, %v697
      %v706 = vadd.f32 %v637, %v698
      %v707 = vadd.f32 %v638, %v699
      %v708 = vadd.f32 %v639, %v700
      %v709 = vlaneseq
      %v710 = vshrl.u32 %v709, 7
      %v711 = vsub.s32 6, %v710
      %v712 = vrot.slane %v270, %v711
      %v713 = vmul.f32 %v661, %v712
      %v714 = vmul.f32 %v662, %v712
      %v715 = vmul.f32 %v663, %v712
      %v716 = vmul.f32 %v664, %v712
      %v717 = vmul.f32 %v665, %v712
      %v718 = vmul.f32 %v666, %v712
      %v719 = vmul.f32 %v667, %v712
      %v720 = vmul.f32 %v668, %v712
      %v721 = vadd.f32 %v652, %v713
      %v722 = vadd.f32 %v653, %v714
      %v723 = vadd.f32 %v654, %v715
      %v724 = vadd.f32 %v655, %v716
      %v725 = vadd.f32 %v656, %v717
      %v726 = vadd.f32 %v657, %v718
      %v727 = vadd.f32 %v658, %v719
      %v728 = vadd.f32 %v659, %v720
      %v729 = vld [vmem:[%s660 + $0x1] sm:$0xff]
      %v730 = vld [vmem:[%s660 + $0x11] sm:$0xff]
      %v731 = vld [vmem:[%s660 + $0x21] sm:$0xff]
      %v732 = vld [vmem:[%s660 + $0x31] sm:$0xff]
      %v733 = vld [vmem:[%s660 + $0x41] sm:$0xff]
      %v734 = vld [vmem:[%s660 + $0x51] sm:$0xff]
      %v735 = vld [vmem:[%s660 + $0x61] sm:$0xff]
      %v736 = vld [vmem:[%s660 + $0x71] sm:$0xff]
      %v737 = vlaneseq
      %v738 = vshrl.u32 %v737, 7
      %v739 = vsub.s32 7, %v738
      %v740 = vrot.slane %v266, %v739
      %v741 = vmul.f32 %v729, %v740
      %v742 = vmul.f32 %v730, %v740
      %v743 = vmul.f32 %v731, %v740
      %v744 = vmul.f32 %v732, %v740
      %v745 = vmul.f32 %v733, %v740
      %v746 = vmul.f32 %v734, %v740
      %v747 = vmul.f32 %v735, %v740
      %v748 = vmul.f32 %v736, %v740
      %v749 = vadd.f32 %v681, %v741
      %v750 = vadd.f32 %v682, %v742
      %v751 = vadd.f32 %v683, %v743
      %v752 = vadd.f32 %v684, %v744
      %v753 = vadd.f32 %v685, %v745
      %v754 = vadd.f32 %v686, %v746
      %v755 = vadd.f32 %v687, %v747
      %v756 = vadd.f32 %v688, %v748
      %v757 = vlaneseq
      %v758 = vshrl.u32 %v757, 7
      %v759 = vsub.s32 7, %v758
      %v760 = vrot.slane %v268, %v759
      %v761 = vmul.f32 %v729, %v760
      %v762 = vmul.f32 %v730, %v760
      %v763 = vmul.f32 %v731, %v760
      %v764 = vmul.f32 %v732, %v760
      %v765 = vmul.f32 %v733, %v760
      %v766 = vmul.f32 %v734, %v760
      %v767 = vmul.f32 %v735, %v760
      %v768 = vmul.f32 %v736, %v760
      %v769 = vadd.f32 %v701, %v761
      %v770 = vadd.f32 %v702, %v762
      %v771 = vadd.f32 %v703, %v763
      %v772 = vadd.f32 %v704, %v764
      %v773 = vadd.f32 %v705, %v765
      %v774 = vadd.f32 %v706, %v766
      %v775 = vadd.f32 %v707, %v767
      %v776 = vadd.f32 %v708, %v768
      %v777 = vlaneseq
      %v778 = vshrl.u32 %v777, 7
      %v779 = vsub.s32 7, %v778
      %v780 = vrot.slane %v270, %v779
      %v781 = vmul.f32 %v729, %v780
      %v782 = vmul.f32 %v730, %v780
      %v783 = vmul.f32 %v731, %v780
      %v784 = vmul.f32 %v732, %v780
      %v785 = vmul.f32 %v733, %v780
      %v786 = vmul.f32 %v734, %v780
      %v787 = vmul.f32 %v735, %v780
      %v788 = vmul.f32 %v736, %v780
      %v789 = vadd.f32 %v721, %v781
      %v790 = vadd.f32 %v722, %v782
      %v791 = vadd.f32 %v723, %v783
      %v792 = vadd.f32 %v724, %v784
      %v793 = vadd.f32 %v725, %v785
      %v794 = vadd.f32 %v726, %v786
      %v795 = vadd.f32 %v727, %v787
      %v796 = vadd.f32 %v728, %v788
      %v797 = vld [vmem:[%s660 + $0x2] sm:$0xff]
      %v798 = vld [vmem:[%s660 + $0x12] sm:$0xff]
      %v799 = vld [vmem:[%s660 + $0x22] sm:$0xff]
      %v800 = vld [vmem:[%s660 + $0x32] sm:$0xff]
      %v801 = vld [vmem:[%s660 + $0x42] sm:$0xff]
      %v802 = vld [vmem:[%s660 + $0x52] sm:$0xff]
      %v803 = vld [vmem:[%s660 + $0x62] sm:$0xff]
      %v804 = vld [vmem:[%s660 + $0x72] sm:$0xff]
      %v805 = vlaneseq
      %v806 = vshrl.u32 %v805, 7
      %v807 = vsub.s32 0, %v806
      %v808 = vrot.slane %v267, %v807
      %v809 = vmul.f32 %v797, %v808
      %v810 = vmul.f32 %v798, %v808
      %v811 = vmul.f32 %v799, %v808
      %v812 = vmul.f32 %v800, %v808
      %v813 = vmul.f32 %v801, %v808
      %v814 = vmul.f32 %v802, %v808
      %v815 = vmul.f32 %v803, %v808
      %v816 = vmul.f32 %v804, %v808
      %v817 = vadd.f32 %v749, %v809
      %v818 = vadd.f32 %v750, %v810
      %v819 = vadd.f32 %v751, %v811
      %v820 = vadd.f32 %v752, %v812
      %v821 = vadd.f32 %v753, %v813
      %v822 = vadd.f32 %v754, %v814
      %v823 = vadd.f32 %v755, %v815
      %v824 = vadd.f32 %v756, %v816
      %v825 = vlaneseq
      %v826 = vshrl.u32 %v825, 7
      %v827 = vsub.s32 0, %v826
      %v828 = vrot.slane %v269, %v827
      %v829 = vmul.f32 %v797, %v828
      %v830 = vmul.f32 %v798, %v828
      %v831 = vmul.f32 %v799, %v828
      %v832 = vmul.f32 %v800, %v828
      %v833 = vmul.f32 %v801, %v828
      %v834 = vmul.f32 %v802, %v828
      %v835 = vmul.f32 %v803, %v828
      %v836 = vmul.f32 %v804, %v828
      %v837 = vadd.f32 %v769, %v829
      %v838 = vadd.f32 %v770, %v830
      %v839 = vadd.f32 %v771, %v831
      %v840 = vadd.f32 %v772, %v832
      %v841 = vadd.f32 %v773, %v833
      %v842 = vadd.f32 %v774, %v834
      %v843 = vadd.f32 %v775, %v835
      %v844 = vadd.f32 %v776, %v836
      %v845 = vlaneseq
      %v846 = vshrl.u32 %v845, 7
      %v847 = vsub.s32 0, %v846
      %v848 = vrot.slane %v271, %v847
      %v849 = vmul.f32 %v797, %v848
      %v850 = vmul.f32 %v798, %v848
      %v851 = vmul.f32 %v799, %v848
      %v852 = vmul.f32 %v800, %v848
      %v853 = vmul.f32 %v801, %v848
      %v854 = vmul.f32 %v802, %v848
      %v855 = vmul.f32 %v803, %v848
      %v856 = vmul.f32 %v804, %v848
      %v857 = vadd.f32 %v789, %v849
      %v858 = vadd.f32 %v790, %v850
      %v859 = vadd.f32 %v791, %v851
      %v860 = vadd.f32 %v792, %v852
      %v861 = vadd.f32 %v793, %v853
      %v862 = vadd.f32 %v794, %v854
      %v863 = vadd.f32 %v795, %v855
      %v864 = vadd.f32 %v796, %v856
      %v865 = vlaneseq
      %v866 = vshrl.u32 %v865, 7
      %v867 = vsub.s32 0, %v866
      %v868 = vrot.slane %v272, %v867
      %v869 = vadd.f32 %v817, %v868
      %v870 = vadd.f32 %v818, %v868
      %v871 = vadd.f32 %v819, %v868
      %v872 = vadd.f32 %v820, %v868
      %v873 = vadd.f32 %v821, %v868
      %v874 = vadd.f32 %v822, %v868
      %v875 = vadd.f32 %v823, %v868
      %v876 = vadd.f32 %v824, %v868
      %v877 = vmax.f32 %v869, 0.0
      %v878 = vmax.f32 %v870, 0.0
      %v879 = vmax.f32 %v871, 0.0
      %v880 = vmax.f32 %v872, 0.0
      %v881 = vmax.f32 %v873, 0.0
      %v882 = vmax.f32 %v874, 0.0
      %v883 = vmax.f32 %v875, 0.0
      %v884 = vmax.f32 %v876, 0.0
      %v885 = vlaneseq
      %v886 = vshrl.u32 %v885, 7
      %v887 = vsub.s32 1, %v886
      %v888 = vrot.slane %v272, %v887
      %v889 = vadd.f32 %v837, %v888
      %v890 = vadd.f32 %v838, %v888
      %v891 = vadd.f32 %v839, %v888
      %v892 = vadd.f32 %v840, %v888
      %v893 = vadd.f32 %v841, %v888
      %v894 = vadd.f32 %v842, %v888
      %v895 = vadd.f32 %v843, %v888
      %v896 = vadd.f32 %v844, %v888
      %v897 = vmax.f32 %v889, 0.0
      %v898 = vmax.f32 %v890, 0.0
      %v899 = vmax.f32 %v891, 0.0
      %v900 = vmax.f32 %v892, 0.0
      %v901 = vmax.f32 %v893, 0.0
      %v902 = vmax.f32 %v894, 0.0
      %v903 = vmax.f32 %v895, 0.0
      %v904 = vmax.f32 %v896, 0.0
      %v905 = vlaneseq
      %v906 = vshrl.u32 %v905, 7
      %v907 = vsub.s32 2, %v906
      %v908 = vrot.slane %v272, %v907
      %v909 = vadd.f32 %v857, %v908
      %v910 = vadd.f32 %v858, %v908
      %v911 = vadd.f32 %v859, %v908
      %v912 = vadd.f32 %v860, %v908
      %v913 = vadd.f32 %v861, %v908
      %v914 = vadd.f32 %v862, %v908
      %v915 = vadd.f32 %v863, %v908
      %v916 = vadd.f32 %v864, %v908
      %v917 = vmax.f32 %v909, 0.0
      %v918 = vmax.f32 %v910, 0.0
      %v919 = vmax.f32 %v911, 0.0
      %v920 = vmax.f32 %v912, 0.0
      %v921 = vmax.f32 %v913, 0.0
      %v922 = vmax.f32 %v914, 0.0
      %v923 = vmax.f32 %v915, 0.0
      %v924 = vmax.f32 %v916, 0.0
      %925 = vst.msk [vmem:[#allocation3] sm:$0xff] %vm225, %v877
      %926 = vst.msk [vmem:[#allocation3 + $0x8] sm:$0xff] %vm225, %v878
      %927 = vst.msk [vmem:[#allocation3 + $0x10] sm:$0xff] %vm225, %v879
      %928 = vst.msk [vmem:[#allocation3 + $0x18] sm:$0xff] %vm225, %v880
      %929 = vst.msk [vmem:[#allocation3 + $0x20] sm:$0xff] %vm225, %v881
      %930 = vst.msk [vmem:[#allocation3 + $0x28] sm:$0xff] %vm225, %v882
      %931 = vst.msk [vmem:[#allocation3 + $0x30] sm:$0xff] %vm225, %v883
      %932 = vst.msk [vmem:[#allocation3 + $0x38] sm:$0xff] %vm225, %v884
      %941 = vrot.lane.b32.xlu0 %v897, 4
      %v942 = vpop.permute.xlu0 %941
      %943 = vrot.lane.b32.xlu0 %v898, 4
      %v944 = vpop.permute.xlu0 %943
      %945 = vrot.lane.b32.xlu0 %v899, 4
      %v946 = vpop.permute.xlu0 %945
      %947 = vrot.lane.b32.xlu0 %v900, 4
      %v948 = vpop.permute.xlu0 %947
      %949 = vrot.lane.b32.xlu0 %v901, 4
      %v950 = vpop.permute.xlu0 %949
      %951 = vrot.lane.b32.xlu0 %v902, 4
      %v952 = vpop.permute.xlu0 %951
      %953 = vrot.lane.b32.xlu0 %v903, 4
      %v954 = vpop.permute.xlu0 %953
      %955 = vrot.lane.b32.xlu0 %v904, 4
      %v956 = vpop.permute.xlu0 %955
      %vm965 = vcmask 64544
      %966 = vst.msk [vmem:[#allocation3] sm:$0xff] %vm965, %v942
      %967 = vst.msk [vmem:[#allocation3 + $0x8] sm:$0xff] %vm965, %v944
      %968 = vst.msk [vmem:[#allocation3 + $0x10] sm:$0xff] %vm965, %v946
      %969 = vst.msk [vmem:[#allocation3 + $0x18] sm:$0xff] %vm965, %v948
      %970 = vst.msk [vmem:[#allocation3 + $0x20] sm:$0xff] %vm965, %v950
      %971 = vst.msk [vmem:[#allocation3 + $0x28] sm:$0xff] %vm965, %v952
      %972 = vst.msk [vmem:[#allocation3 + $0x30] sm:$0xff] %vm965, %v954
      %973 = vst.msk [vmem:[#allocation3 + $0x38] sm:$0xff] %vm965, %v956
      %982 = vrot.lane.b32.xlu0 %v917, 8
      %v983 = vpop.permute.xlu0 %982
      %984 = vrot.lane.b32.xlu0 %v918, 8
      %v985 = vpop.permute.xlu0 %984
      %986 = vrot.lane.b32.xlu0 %v919, 8
      %v987 = vpop.permute.xlu0 %986
      %988 = vrot.lane.b32.xlu0 %v920, 8
      %v989 = vpop.permute.xlu0 %988
      %990 = vrot.lane.b32.xlu0 %v921, 8
      %v991 = vpop.permute.xlu0 %990
      %992 = vrot.lane.b32.xlu0 %v922, 8
      %v993 = vpop.permute.xlu0 %992
      %994 = vrot.lane.b32.xlu0 %v923, 8
      %v995 = vpop.permute.xlu0 %994
      %996 = vrot.lane.b32.xlu0 %v924, 8
      %v997 = vpop.permute.xlu0 %996
      %vm1006 = vcmask 97344
      %1007 = vst.msk [vmem:[#allocation3] sm:$0xff] %vm1006, %v983
      %1008 = vst.msk [vmem:[#allocation3 + $0x8] sm:$0xff] %vm1006, %v985
      %1009 = vst.msk [vmem:[#allocation3 + $0x10] sm:$0xff] %vm1006, %v987
      %1010 = vst.msk [vmem:[#allocation3 + $0x18] sm:$0xff] %vm1006, %v989
      %1011 = vst.msk [vmem:[#allocation3 + $0x20] sm:$0xff] %vm1006, %v991
      %1012 = vst.msk [vmem:[#allocation3 + $0x28] sm:$0xff] %vm1006, %v993
      %1013 = vst.msk [vmem:[#allocation3 + $0x30] sm:$0xff] %vm1006, %v995
      %1014 = vst.msk [vmem:[#allocation3 + $0x38] sm:$0xff] %vm1006, %v997
      %v1015 = vld [vmem:[#allocation3] sm:$0xff]
      %v1016 = vld [vmem:[#allocation3 + $0x8] sm:$0xff]
      %v1017 = vld [vmem:[#allocation3 + $0x10] sm:$0xff]
      %v1018 = vld [vmem:[#allocation3 + $0x18] sm:$0xff]
      %v1019 = vld [vmem:[#allocation3 + $0x20] sm:$0xff]
      %v1020 = vld [vmem:[#allocation3 + $0x28] sm:$0xff]
      %v1021 = vld [vmem:[#allocation3 + $0x30] sm:$0xff]
      %v1022 = vld [vmem:[#allocation3 + $0x38] sm:$0xff]
      %v1024 = vlaneseq
      %v1025 = vshrl.u32 %v1024, 7
      %v1026 = vsub.s32 0, %v1025
      %v1027 = vrot.slane %v275, %v1026
      %vm1029 = vcmask 97280
      %v1031 = vsel %vm1029, %v1015, 0
      %v1034 = vsel %vm1029, %v1016, 0
      %v1037 = vsel %vm1029, %v1017, 0
      %v1040 = vsel %vm1029, %v1018, 0
      %v1043 = vsel %vm1029, %v1019, 0
      %v1046 = vsel %vm1029, %v1020, 0
      %v1049 = vsel %vm1029, %v1021, 0
      %v1052 = vsel %vm1029, %v1022, 0
      %vm1054 = vcmask 1043456
      %v1056 = vsel %vm1054, %v274, 0
      %1058 = vmatprep.subr.mxu0 0.0
      %1059 = vmatpush1.msra.mxu0 %v273
      %1060 = vmatprep.subr.mxu0 0.0
      %1061 = vmatpush1.msra.mxu0 %v1056
      %1062 = vmatprep.subr.mxu0 0.0
      %1063 = vmatpush1.msra.mxu0 0.0
      %1064 = vmatprep.subr.mxu0 0.0
      %1065 = vmatpush1.msra.mxu0 0.0
      %1066 = vmatprep.subr.mxu0 0.0
      %1067 = vmatpush1.msra.mxu0 0.0
      %1068 = vmatprep.subr.mxu0 0.0
      %1069 = vmatpush1.msra.mxu0 0.0
      %1070 = vmatprep.subr.mxu0 0.0
      %1071 = vmatpush1.msra.mxu0 0.0
      %1072 = vmatprep.subr.mxu0 0.0
      %1073 = vmatpush1.msra.mxu0 0.0
      %1074 = vmatprep.subr.mxu0 0.0
      %1075 = vmatpush1.msra.mxu0 0.0
      %1076 = vmatprep.subr.mxu0 0.0
      %1077 = vmatpush1.msra.mxu0 0.0
      %1078 = vmatprep.subr.mxu0 0.0
      %1079 = vmatpush1.msra.mxu0 0.0
      %1080 = vmatprep.subr.mxu0 0.0
      %1081 = vmatpush1.msra.mxu0 0.0
      %1082 = vmatprep.subr.mxu0 0.0
      %1083 = vmatpush1.msra.mxu0 0.0
      %1084 = vmatprep.subr.mxu0 0.0
      %1085 = vmatpush1.msra.mxu0 0.0
      %1086 = vmatprep.subr.mxu0 0.0
      %1087 = vmatpush1.msra.mxu0 0.0
      %1088 = vmatprep.subr.mxu0 0.0
      %1089 = vmatpush1.msra.mxu0 0.0
      %1090 = vmatprep.subr.mxu0 0.0
      %1091 = vmatpush1.msra.mxu0 0.0
      %1092 = vmatprep.subr.mxu0 0.0
      %1093 = vmatpush1.msra.mxu0 0.0
      %1094 = vmatprep.subr.mxu0 0.0
      %1095 = vmatpush1.msra.mxu0 0.0
      %1096 = vmatprep.subr.mxu0 0.0
      %1097 = vmatpush1.msra.mxu0 0.0
      %1098 = vmatprep.subr.mxu0 0.0
      %1099 = vmatpush1.msra.mxu0 0.0
      %1100 = vmatprep.subr.mxu0 0.0
      %1101 = vmatpush1.msra.mxu0 0.0
      %1102 = vmatprep.subr.mxu0 0.0
      %1103 = vmatpush1.msra.mxu0 0.0
      %1104 = vmatprep.subr.mxu0 0.0
      %1105 = vmatpush1.msra.mxu0 0.0
      %1106 = vmatprep.subr.mxu0 0.0
      %1107 = vmatpush1.msra.mxu0 0.0
      %1108 = vmatprep.subr.mxu0 0.0
      %1109 = vmatpush1.msra.mxu0 0.0
      %1110 = vmatprep.subr.mxu0 0.0
      %1111 = vmatpush1.msra.mxu0 0.0
      %1112 = vmatprep.subr.mxu0 0.0
      %1113 = vmatpush1.msra.mxu0 0.0
      %1114 = vmatprep.subr.mxu0 0.0
      %1115 = vmatpush1.msra.mxu0 0.0
      %1116 = vmatprep.subr.mxu0 0.0
      %1117 = vmatpush1.msra.mxu0 0.0
      %1118 = vmatprep.subr.mxu0 0.0
      %1119 = vmatpush1.msra.mxu0 0.0
      %1120 = vmatprep.subr.mxu0 0.0
      %1121 = vmatpush1.msra.mxu0 0.0
      %1122 = vmatprep.mubr.f32.mxu0 0.0
      %1123 = vmatmul.mubr.f32.gmra.mrb[0].mxu0 %v1031
      %v1124 = vpop.f32.mrb[0].mxu0
      %v1125 = vadd.f32 %v1027, %v1124
      %v1126 = vpop.f32.mrb[0].mxu0
      %1127 = vmatprep.mubr.f32.mxu0 0.0
      %1128 = vmatmul.mubr.f32.gmra.mrb[0].mxu0 %v1034
      %v1129 = vpop.f32.mrb[0].mxu0
      %v1130 = vadd.f32 %v1027, %v1129
      %v1131 = vpop.f32.mrb[0].mxu0
      %1132 = vmatprep.mubr.f32.mxu0 0.0
      %1133 = vmatmul.mubr.f32.gmra.mrb[0].mxu0 %v1037
      %v1134 = vpop.f32.mrb[0].mxu0
      %v1135 = vadd.f32 %v1027, %v1134
      %v1136 = vpop.f32.mrb[0].mxu0
      %1137 = vmatprep.mubr.f32.mxu0 0.0
      %1138 = vmatmul.mubr.f32.gmra.mrb[0].mxu0 %v1040
      %v1139 = vpop.f32.mrb[0].mxu0
      %v1140 = vadd.f32 %v1027, %v1139
      %v1141 = vpop.f32.mrb[0].mxu0
      %1142 = vmatprep.mubr.f32.mxu0 0.0
      %1143 = vmatmul.mubr.f32.gmra.mrb[0].mxu0 %v1043
      %v1144 = vpop.f32.mrb[0].mxu0
      %v1145 = vadd.f32 %v1027, %v1144
      %v1146 = vpop.f32.mrb[0].mxu0
      %1147 = vmatprep.mubr.f32.mxu0 0.0
      %1148 = vmatmul.mubr.f32.gmra.mrb[0].mxu0 %v1046
      %v1149 = vpop.f32.mrb[0].mxu0
      %v1150 = vadd.f32 %v1027, %v1149
      %v1151 = vpop.f32.mrb[0].mxu0
      %1152 = vmatprep.mubr.f32.mxu0 0.0
      %1153 = vmatmul.mubr.f32.gmra.mrb[0].mxu0 %v1049
      %v1154 = vpop.f32.mrb[0].mxu0
      %v1155 = vadd.f32 %v1027, %v1154
      %v1156 = vpop.f32.mrb[0].mxu0
      %1157 = vmatprep.mubr.f32.mxu0 0.0
      %1158 = vmatmul.mubr.f32.gmra.mrb[0].mxu0 %v1052
      %v1159 = vpop.f32.mrb[0].mxu0
      %v1160 = vadd.f32 %v1027, %v1159
      %v1161 = vpop.f32.mrb[0].mxu0
      %1162 = vdwg.mxu0
      %vm1163 = vcmask 195584
      %1164 = vst.msk [vmem:[%s224] sm:$0xff] %vm1163, %v1125
      %1165 = vst.msk [vmem:[%s224 + $0x8] sm:$0xff] %vm1163, %v1130
      %1166 = vst.msk [vmem:[%s224 + $0x10] sm:$0xff] %vm1163, %v1135
      %1167 = vst.msk [vmem:[%s224 + $0x18] sm:$0xff] %vm1163, %v1140
      %1168 = vst.msk [vmem:[%s224 + $0x20] sm:$0xff] %vm1163, %v1145
      %1169 = vst.msk [vmem:[%s224 + $0x28] sm:$0xff] %vm1163, %v1150
      %1170 = vst.msk [vmem:[%s224 + $0x30] sm:$0xff] %vm1163, %v1155
      %1171 = vst.msk [vmem:[%s224 + $0x38] sm:$0xff] %vm1163, %v1160
      %p1172 = scmp.lt.s32.totalorder %s16, 1
      %s1173 = scalar_select %p1172, %s16, 1
      %s1174 = smul.addr %s1173, 8
      %s1175 = smul.addr %s1174, 8
      %s1176 = scalar_lea.vmem %s5, %s1175
      // Predicated region
      $region41: #{tpu_custom_call.1} parent=39 // pred_check
        %p1177 = pneg %p144
      $region42: #{tpu_custom_call.1} parent=39 // pred_check_branch
        %1179 = sbr.rel (%p1177) target = $region44
      $region43: #{tpu_custom_call.1} parent=39 // pred_region
        _
      $region44: #{tpu_custom_call.1} parent=39 // pred_fallthru
        _
    $region40: #{tpu_custom_call.1} parent=5 // pred_fallthru
      _
    %p1180 = scmp.le.s32.totalorder 2, %s11
    // Predicated region
    $region45: #{tpu_custom_call.1} parent=5 // pred_check
      %p1181 = pneg %p1180
    $region46: #{tpu_custom_call.1} parent=5 // pred_check_branch
      %1183 = sbr.rel (%p1181) target = $region48
    $region47: #{tpu_custom_call.1} parent=5 // pred_region
      %s1184 = ssub.s32 %s11, 2
      // Predicated region
      $region49: #{tpu_custom_call.1} parent=47 // pred_check
        %p1185 = pneg %p150
      $region50: #{tpu_custom_call.1} parent=47 // pred_check_branch
        %1187 = sbr.rel (%p1185) target = $region52
      $region51: #{tpu_custom_call.1} parent=47 // pred_region
        %p1188 = scmp.lt.s32.totalorder %s17, 1
        %s1189 = scalar_select %p1188, %s17, 1
        %s1190 = smul.addr %s1189, 8
        %s1191 = smul.addr %s1190, 8
        %s1192 = scalar_lea.vmem %s5, %s1191
      $region52: #{tpu_custom_call.1} parent=47 // pred_fallthru
        _
    $region48: #{tpu_custom_call.1} parent=5 // pred_fallthru
      _
  $region6: #{tpu_custom_call.1} parent=0 // loop_footer
    %s15 = sadd.s32 1, %s11
  $region7: #{tpu_custom_call.1} parent=0 // loop_footer_branch
    %10 = sbr.rel target = $region3
  $region8: #{tpu_custom_call.1} parent=0 // loop_exit
    _

</llo_original>
